<compile_context>
chip_gen: v7x
topology: tpu7x:2x2x1
jax: 0.10.0
libtpu: 0.0.40
codegen_flags: <defaults>
</compile_context>

<pallas_src>
import functools
import math

import jax
import jax.numpy as jnp
from jax.experimental import pallas as pl
from jax.experimental.pallas import tpu as pltpu


VMEM_LIMIT_BYTES = 48 * 1024 * 1024     # headroom below v7x's 64 MiB VMEM
_LN_EPS = 1e-5                          # GPT-2 layer_norm_epsilon
_GELU_C = math.sqrt(2.0 / math.pi)
_ROW_TILE = 256                         # M-tile for linear/LN/MLP kernels
_SEQ_TILE = 512                         # S-tile for read-in kernel
_Q_TILE = 256                           # query-row tile for attention


def _compiler_params(n_grid_axes):
    return pltpu.CompilerParams(
        dimension_semantics=("parallel",) * n_grid_axes,
        vmem_limit_bytes=VMEM_LIMIT_BYTES)


def _tile(total, target):
    return total if total <= target else target


def _ln(x, g, b):
    mu = jnp.mean(x, axis=-1, keepdims=True)
    var = jnp.mean(jnp.square(x - mu), axis=-1, keepdims=True)
    return (x - mu) * jax.lax.rsqrt(var + _LN_EPS) * g + b


# ----------------------------- Pallas kernels -----------------------------

def _read_in_kernel(zs_ref, w_ref, b_ref, wpe_ref, o_ref):
    """o = zs @ W_in + b_in + wpe  (read-in linear fused with pos-embedding)."""
    x = zs_ref[0].astype(jnp.bfloat16)                       # (TS, Dx)
    h = jnp.dot(x, w_ref[...], preferred_element_type=jnp.float32)
    o_ref[0] = (h + b_ref[...] + wpe_ref[...]).astype(o_ref.dtype)


def read_in_embed(zs, w, b, wpe):
    bsz, s, dx = zs.shape
    d = w.shape[1]
    ts = _tile(s, _SEQ_TILE)
    return pl.pallas_call(
        _read_in_kernel,
        grid=(bsz, pl.cdiv(s, ts)),
        in_specs=[
            pl.BlockSpec((1, ts, dx), lambda i, j: (i, j, 0)),
            pl.BlockSpec((dx, d), lambda i, j: (0, 0)),
            pl.BlockSpec((1, d), lambda i, j: (0, 0)),
            pl.BlockSpec((ts, d), lambda i, j: (j, 0)),
        ],
        out_specs=pl.BlockSpec((1, ts, d), lambda i, j: (i, j, 0)),
        out_shape=jax.ShapeDtypeStruct((bsz, s, d), jnp.float32),
        compiler_params=_compiler_params(2),
    )(zs, w, b.reshape(1, d), wpe[:s])


def _ln_linear_kernel(x_ref, g_ref, b_ref, w_ref, bias_ref, o_ref):
    """o = LayerNorm(x) @ W + bias   (LN in f32, matmul in bf16/f32-acc)."""
    xn = _ln(x_ref[...], g_ref[...], b_ref[...])
    y = jnp.dot(xn.astype(jnp.bfloat16), w_ref[...],
                preferred_element_type=jnp.float32) + bias_ref[...]
    o_ref[...] = y.astype(o_ref.dtype)


def ln_linear(x, g, b, w, bias):
    m, din = x.shape
    dout = w.shape[1]
    tm = _tile(m, _ROW_TILE)
    return pl.pallas_call(
        _ln_linear_kernel,
        grid=(pl.cdiv(m, tm),),
        in_specs=[
            pl.BlockSpec((tm, din), lambda i: (i, 0)),
            pl.BlockSpec((1, din), lambda i: (0, 0)),
            pl.BlockSpec((1, din), lambda i: (0, 0)),
            pl.BlockSpec((din, dout), lambda i: (0, 0)),   # weight stays resident
            pl.BlockSpec((1, dout), lambda i: (0, 0)),
        ],
        out_specs=pl.BlockSpec((tm, dout), lambda i: (i, 0)),
        out_shape=jax.ShapeDtypeStruct((m, dout), jnp.float32),
        compiler_params=_compiler_params(1),
    )(x, g.reshape(1, din), b.reshape(1, din), w, bias.reshape(1, dout))


def _ln_mlp_residual_kernel(h_ref, g_ref, b_ref, w1_ref, b1_ref,
                            w2_ref, b2_ref, o_ref):
    """o = h + FC2(gelu_new(FC1(LayerNorm(h))))  -- whole MLP sub-block fused."""
    h = h_ref[...]
    xn = _ln(h, g_ref[...], b_ref[...])
    u = jnp.dot(xn.astype(jnp.bfloat16), w1_ref[...],
                preferred_element_type=jnp.float32) + b1_ref[...]
    # GPT-2 "gelu_new" (tanh approximation), kept in f32 (v5e has no bf16 VPU).
    u = 0.5 * u * (1.0 + jnp.tanh(_GELU_C * (u + 0.044715 * u * u * u)))
    y = jnp.dot(u.astype(jnp.bfloat16), w2_ref[...],
                preferred_element_type=jnp.float32) + b2_ref[...]
    o_ref[...] = (h + y).astype(o_ref.dtype)


def ln_mlp_residual(h, g, b, w1, b1, w2, b2):
    m, d = h.shape
    dff = w1.shape[1]
    tm = _tile(m, _ROW_TILE)
    return pl.pallas_call(
        _ln_mlp_residual_kernel,
        grid=(pl.cdiv(m, tm),),
        in_specs=[
            pl.BlockSpec((tm, d), lambda i: (i, 0)),
            pl.BlockSpec((1, d), lambda i: (0, 0)),
            pl.BlockSpec((1, d), lambda i: (0, 0)),
            pl.BlockSpec((d, dff), lambda i: (0, 0)),
            pl.BlockSpec((1, dff), lambda i: (0, 0)),
            pl.BlockSpec((dff, d), lambda i: (0, 0)),
            pl.BlockSpec((1, d), lambda i: (0, 0)),
        ],
        out_specs=pl.BlockSpec((tm, d), lambda i: (i, 0)),
        out_shape=jax.ShapeDtypeStruct((m, d), jnp.float32),
        compiler_params=_compiler_params(1),
    )(h, g.reshape(1, d), b.reshape(1, d), w1, b1.reshape(1, dff),
      w2, b2.reshape(1, d))


def _attn_proj_res_kernel(q_ref, kv_ref, w_ref, b_ref, res_ref, o_ref, *,
                          n_head):
    """Causal MHA + output projection + residual for one batch / one q-tile.

    All heads are processed from the (S, 3D) QKV slab (GPT-2 Conv1D layout),
    so no head split/merge transposes are needed outside the kernel.  The
    concatenated context stays in VMEM, goes straight through the output
    projection, and the residual add is folded into the final store, saving
    one full (B, S, D) HBM round-trip per layer vs. a separate attention
    kernel.
    """
    q_slab = q_ref[0]                          # (TQ, 3D) f32; only Q cols used
    kv = kv_ref[0]                             # (S, 3D) f32
    tq = q_slab.shape[0]
    s = kv.shape[0]
    d = kv.shape[1] // 3
    dh = d // n_head
    scale = 1.0 / math.sqrt(dh)

    q_start = pl.program_id(1) * tq
    row = q_start + jax.lax.broadcasted_iota(jnp.int32, (tq, s), 0)
    col = jax.lax.broadcasted_iota(jnp.int32, (tq, s), 1)
    causal = col <= row

    # TODO(synk): for very long S, switch to flash-style KV blocking with
    # online softmax + pl.when skipping of fully-masked KV blocks.
    outs = []
    for h in range(n_head):
        q = (q_slab[:, h * dh:(h + 1) * dh] * scale).astype(jnp.bfloat16)
        k = kv[:, d + h * dh: d + (h + 1) * dh].astype(jnp.bfloat16)
        v = kv[:, 2 * d + h * dh: 2 * d + (h + 1) * dh].astype(jnp.bfloat16)
        scores = jax.lax.dot_general(q, k, (((1,), (1,)), ((), ())),
                                     preferred_element_type=jnp.float32)
        scores = jnp.where(causal, scores, jnp.float32(-1e30))
        mx = jnp.max(scores, axis=-1, keepdims=True)
        p = jnp.exp(scores - mx)
        denom = jnp.sum(p, axis=-1, keepdims=True)
        pv = jax.lax.dot_general(p.astype(jnp.bfloat16), v,
                                 (((1,), (0,)), ((), ())),
                                 preferred_element_type=jnp.float32)
        outs.append(pv * pl.reciprocal(denom, approx=True))
    ctx = jnp.concatenate(outs, axis=-1)                        # (TQ, D) f32

    # fused output projection + residual add
    y = jnp.dot(ctx.astype(jnp.bfloat16), w_ref[...],
                preferred_element_type=jnp.float32) + b_ref[...]
    o_ref[0] = (res_ref[0] + y).astype(o_ref.dtype)


def attention_proj_residual(qkv, proj_w, proj_b, res, *, n_head):
    """qkv: (B, S, 3D), res: (B, S, D) -> (B, S, D)  = res + Proj(MHA(qkv))."""
    bsz, s, three_d = qkv.shape
    d = three_d // 3
    tq = _tile(s, _Q_TILE)
    kernel = functools.partial(_attn_proj_res_kernel, n_head=n_head)
    return pl.pallas_call(
        kernel,
        grid=(bsz, pl.cdiv(s, tq)),
        in_specs=[
            pl.BlockSpec((1, tq, three_d), lambda i, j: (i, j, 0)),  # Q-row tile
            pl.BlockSpec((1, s, three_d), lambda i, j: (i, 0, 0)),   # full K/V
            pl.BlockSpec((d, d), lambda i, j: (0, 0)),               # proj weight
            pl.BlockSpec((1, d), lambda i, j: (0, 0)),               # proj bias
            pl.BlockSpec((1, tq, d), lambda i, j: (i, j, 0)),        # residual
        ],
        out_specs=pl.BlockSpec((1, tq, d), lambda i, j: (i, j, 0)),
        out_shape=jax.ShapeDtypeStruct((bsz, s, d), jnp.float32),
        compiler_params=_compiler_params(2),
    )(qkv, qkv, proj_w, proj_b.reshape(1, d), res)


# --------------------------- model construction ---------------------------

def init_params(key, *, n_dims, n_positions, n_embd, n_layer, n_y):
    """Matmul weights stored in bf16 (MXU-native); LN params / biases in f32."""
    def normal_f32(k, shape):
        return jax.random.normal(k, shape, dtype=jnp.float32) * 0.02

    keys = iter(jax.random.split(key, 4 + 4 * n_layer))

    read_out_w = normal_f32(next(keys), (n_embd, 1))
    # Lane-dense padded readout: column 0 holds the real weight, rest zero.
    read_out_w_pad = jnp.zeros((n_embd, 128), jnp.float32).at[:, 0:1].set(read_out_w)

    params = {
        "read_in_w": normal_f32(next(keys), (n_dims, n_embd)).astype(jnp.bfloat16),
        "read_in_b": jnp.zeros((n_embd,), jnp.float32),
        "wpe": normal_f32(next(keys), ((n_y + 1) * n_positions, n_embd)),
        "lnf_g": jnp.ones((n_embd,), jnp.float32),
        "lnf_b": jnp.zeros((n_embd,), jnp.float32),
        "read_out_w": read_out_w_pad.astype(jnp.bfloat16),
        "read_out_b": jnp.zeros((128,), jnp.float32),
        "blocks": [],
    }
    for _ in range(n_layer):
        params["blocks"].append({
            "ln1_g": jnp.ones((n_embd,), jnp.float32),
            "ln1_b": jnp.zeros((n_embd,), jnp.float32),
            # GPT-2 Conv1D layout: (in_features, out_features)
            "attn_w": normal_f32(next(keys), (n_embd, 3 * n_embd)).astype(jnp.bfloat16),
            "attn_b": jnp.zeros((3 * n_embd,), jnp.float32),
            "proj_w": normal_f32(next(keys), (n_embd, n_embd)).astype(jnp.bfloat16),
            "proj_b": jnp.zeros((n_embd,), jnp.float32),
            "ln2_g": jnp.ones((n_embd,), jnp.float32),
            "ln2_b": jnp.zeros((n_embd,), jnp.float32),
            "fc_w": normal_f32(next(keys), (n_embd, 4 * n_embd)).astype(jnp.bfloat16),
            "fc_b": jnp.zeros((4 * n_embd,), jnp.float32),
            "fc2_w": normal_f32(next(keys), (4 * n_embd, n_embd)).astype(jnp.bfloat16),
            "fc2_b": jnp.zeros((n_embd,), jnp.float32),
        })
    return params


def combine(xs, ys):
    """Interleave x's and y's: (B,P,D),(B,P) -> (B,2P,D)."""
    b, p, d = xs.shape
    ys_wide = jnp.concatenate(
        [ys[..., None], jnp.zeros((b, p, d - 1), xs.dtype)], axis=-1)
    zs = jnp.stack([xs, ys_wide], axis=2)           # (B, P, 2, D)
    return zs.reshape(b, 2 * p, d)


def transformer_forward(params, xs, ys, *, n_head):
    zs = combine(xs, ys)                                           # (B, S, Dx)
    b, s, _ = zs.shape
    d = params["wpe"].shape[-1]

    # read-in linear + positional embedding, fused
    h = read_in_embed(zs, params["read_in_w"], params["read_in_b"],
                      params["wpe"])                               # (B, S, D)
    h2 = h.reshape(b * s, d)

    for blk in params["blocks"]:
        # LN1 -> QKV projection (fused)
        qkv = ln_linear(h2, blk["ln1_g"], blk["ln1_b"],
                        blk["attn_w"], blk["attn_b"])              # (M, 3D)
        # causal MHA + output projection + residual, all in one kernel
        h3 = attention_proj_residual(qkv.reshape(b, s, 3 * d),
                                     blk["proj_w"], blk["proj_b"],
                                     h2.reshape(b, s, d), n_head=n_head)
        h2 = h3.reshape(b * s, d)
        # LN2 -> MLP -> residual (fused)
        h2 = ln_mlp_residual(h2, blk["ln2_g"], blk["ln2_b"],
                             blk["fc_w"], blk["fc_b"],
                             blk["fc2_w"], blk["fc2_b"])

    # readout: only even (x) positions are kept, so slice BEFORE final LN.
    h_even = h2.reshape(b, s, d)[:, ::2, :]                        # (B, P, D)
    p = h_even.shape[1]
    y = ln_linear(h_even.reshape(b * p, d), params["lnf_g"], params["lnf_b"],
                  params["read_out_w"], params["read_out_b"])      # (B*P, 128)
    return y[:, 0].reshape(b, p)                                   # (B, P)


# --------------------------------- main ------------------------------------

if __name__ == "__main__":
    # Small, forward-consistent shapes.
    n_dims, n_positions, n_embd, n_layer, n_head, n_y = 8, 8, 32, 2, 4, 1
    batch = 2

    key = jax.random.PRNGKey(0)
    kx, ky, kp = jax.random.split(key, 3)
    xs = jax.random.normal(kx, (batch, n_positions, n_dims), dtype=jnp.float32)
    ys = jax.random.normal(ky, (batch, n_positions), dtype=jnp.float32)

    params = init_params(kp, n_dims=n_dims, n_positions=n_positions,
                         n_embd=n_embd, n_layer=n_layer, n_y=n_y)

    fwd = jax.jit(functools.partial(transformer_forward, n_head=n_head))
    preds = fwd(params, xs, ys)
    jax.block_until_ready(preds)
    assert preds.shape == (batch, n_positions)
    assert bool(jnp.all(jnp.isfinite(preds)))
    print("KERNEL_OK")
</pallas_src>

<mosaic_0001>
module attributes {stable_mosaic.version = 11 : i64} {
  func.func @_read_in_kernel(%arg0: i32, %arg1: i32, %arg2: memref<1x16x8xf32, #tpu.memory_space<vmem>>, %arg3: memref<8x32xbf16, #tpu.memory_space<vmem>>, %arg4: memref<1x32xf32, #tpu.memory_space<vmem>>, %arg5: memref<16x32xf32, #tpu.memory_space<vmem>>, %arg6: memref<1x16x32xf32, #tpu.memory_space<vmem>>) attributes {dimension_semantics = [#tpu.dimension_semantics<parallel>, #tpu.dimension_semantics<parallel>], iteration_bounds = array<i64: 2, 1>, scalar_prefetch = 0 : i64, scratch_operands = 0 : i64, tpu.core_type = #tpu.core_type<tc>, window_params = [{transform_indices = @transform_0, window_bounds = array<i64: 1, 16, 8>}, {pipeline_mode = #tpu.pipeline_mode<synchronous>, transform_indices = @transform_1, window_bounds = array<i64: 8, 32>}, {pipeline_mode = #tpu.pipeline_mode<synchronous>, transform_indices = @transform_2, window_bounds = array<i64: 1, 32>}, {transform_indices = @transform_3, window_bounds = array<i64: 16, 32>}, {transform_indices = @transform_4, window_bounds = array<i64: 1, 16, 32>}]} {
    %c0 = arith.constant 0 : index
    %c0_0 = arith.constant 0 : index
    %c0_1 = arith.constant 0 : index
    %0 = vector.load %arg2[%c0, %c0_0, %c0_1] : memref<1x16x8xf32, #tpu.memory_space<vmem>>, vector<1x16x8xf32>
    %1 = vector.shape_cast %0 : vector<1x16x8xf32> to vector<16x8xf32>
    %2 = arith.truncf %1 : vector<16x8xf32> to vector<16x8xbf16>
    %c0_2 = arith.constant 0 : index
    %c0_3 = arith.constant 0 : index
    %3 = vector.load %arg3[%c0_2, %c0_3] : memref<8x32xbf16, #tpu.memory_space<vmem>>, vector<8x32xbf16>
    %cst = arith.constant dense<0.000000e+00> : vector<16x32xf32>
    %4 = tpu.matmul %2, %3, %cst {dimension_numbers = #tpu.dot_dimension_numbers<[1], [0], [0], [1], [0, 0, 1, 1], [], []>} : vector<16x8xbf16>, vector<8x32xbf16>, vector<16x32xf32> -> vector<16x32xf32>
    %c0_4 = arith.constant 0 : index
    %c0_5 = arith.constant 0 : index
    %5 = vector.load %arg4[%c0_4, %c0_5] : memref<1x32xf32, #tpu.memory_space<vmem>>, vector<1x32xf32>
    %6 = vector.broadcast %5 : vector<1x32xf32> to vector<16x32xf32>
    %7 = arith.addf %4, %6 : vector<16x32xf32>
    %c0_6 = arith.constant 0 : index
    %c0_7 = arith.constant 0 : index
    %8 = vector.load %arg5[%c0_6, %c0_7] : memref<16x32xf32, #tpu.memory_space<vmem>>, vector<16x32xf32>
    %9 = arith.addf %7, %8 : vector<16x32xf32>
    %c0_8 = arith.constant 0 : index
    %c0_9 = arith.constant 0 : index
    %c0_10 = arith.constant 0 : index
    %10 = vector.load %arg6[%c0_8, %c0_9, %c0_10] : memref<1x16x32xf32, #tpu.memory_space<vmem>>, vector<1x16x32xf32>
    %11 = vector.shape_cast %10 : vector<1x16x32xf32> to vector<16x32xf32>
    %12 = vector.shape_cast %9 : vector<16x32xf32> to vector<1x16x32xf32>
    tpu.vector_store %arg6[%c0_8, %c0_9, %c0_10], %12 {strides = array<i32>} : memref<1x16x32xf32, #tpu.memory_space<vmem>>, vector<1x16x32xf32>,
    return
  }
  func.func @transform_0(%arg0: i32, %arg1: i32) -> (i32, i32, i32) {
    %c0_i32 = arith.constant 0 : i32
    %c0_i32_0 = arith.constant 0 : i32
    return %arg0, %arg1, %c0_i32 : i32, i32, i32
  }
  func.func @transform_1(%arg0: i32, %arg1: i32) -> (i32, i32) {
    %c0_i32 = arith.constant 0 : i32
    %c0_i32_0 = arith.constant 0 : i32
    %c0_i32_1 = arith.constant 0 : i32
    return %c0_i32, %c0_i32_0 : i32, i32
  }
  func.func @transform_2(%arg0: i32, %arg1: i32) -> (i32, i32) {
    %c0_i32 = arith.constant 0 : i32
    %c0_i32_0 = arith.constant 0 : i32
    %c0_i32_1 = arith.constant 0 : i32
    return %c0_i32, %c0_i32_0 : i32, i32
  }
  func.func @transform_3(%arg0: i32, %arg1: i32) -> (i32, i32) {
    %c0_i32 = arith.constant 0 : i32
    %c0_i32_0 = arith.constant 0 : i32
    return %arg1, %c0_i32 : i32, i32
  }
  func.func @transform_4(%arg0: i32, %arg1: i32) -> (i32, i32, i32) {
    %c0_i32 = arith.constant 0 : i32
    %c0_i32_0 = arith.constant 0 : i32
    return %arg0, %arg1, %c0_i32 : i32, i32, i32
  }
}

module attributes {stable_mosaic.version = 11 : i64} {
  func.func @_attn_proj_res_kernel(%arg0: i32, %arg1: i32, %arg2: memref<1x16x96xf32, #tpu.memory_space<vmem>>, %arg3: memref<1x16x96xf32, #tpu.memory_space<vmem>>, %arg4: memref<32x32xbf16, #tpu.memory_space<vmem>>, %arg5: memref<1x32xf32, #tpu.memory_space<vmem>>, %arg6: memref<1x16x32xf32, #tpu.memory_space<vmem>>, %arg7: memref<1x16x32xf32, #tpu.memory_space<vmem>>) attributes {dimension_semantics = [#tpu.dimension_semantics<parallel>, #tpu.dimension_semantics<parallel>], iteration_bounds = array<i64: 2, 1>, scalar_prefetch = 0 : i64, scratch_operands = 0 : i64, tpu.core_type = #tpu.core_type<tc>, window_params = [{transform_indices = @transform_0, window_bounds = array<i64: 1, 16, 96>}, {transform_indices = @transform_1, window_bounds = array<i64: 1, 16, 96>}, {pipeline_mode = #tpu.pipeline_mode<synchronous>, transform_indices = @transform_2, window_bounds = array<i64: 32, 32>}, {pipeline_mode = #tpu.pipeline_mode<synchronous>, transform_indices = @transform_3, window_bounds = array<i64: 1, 32>}, {transform_indices = @transform_4, window_bounds = array<i64: 1, 16, 32>}, {transform_indices = @transform_5, window_bounds = array<i64: 1, 16, 32>}]} {
    %c0 = arith.constant 0 : index
    %c0_0 = arith.constant 0 : index
    %c0_1 = arith.constant 0 : index
    %0 = vector.load %arg2[%c0, %c0_0, %c0_1] : memref<1x16x96xf32, #tpu.memory_space<vmem>>, vector<1x16x96xf32>
    %1 = vector.shape_cast %0 : vector<1x16x96xf32> to vector<16x96xf32>
    %c0_2 = arith.constant 0 : index
    %c0_3 = arith.constant 0 : index
    %c0_4 = arith.constant 0 : index
    %2 = vector.load %arg3[%c0_2, %c0_3, %c0_4] : memref<1x16x96xf32, #tpu.memory_space<vmem>>, vector<1x16x96xf32>
    %3 = vector.shape_cast %2 : vector<1x16x96xf32> to vector<16x96xf32>
    %c16_i32 = arith.constant 16 : i32
    %4 = arith.muli %arg1, %c16_i32 : i32
    %5 = tpu.iota {dimensions = array<i32: 0>} : vector<16x16xi32>
    %6 = vector.broadcast %4 : i32 to vector<16x16xi32>
    %7 = arith.addi %6, %5 : vector<16x16xi32>
    %8 = tpu.iota {dimensions = array<i32: 1>} : vector<16x16xi32>
    %9 = arith.cmpi sle, %8, %7 : vector<16x16xi32>
    %10 = vector.extract_strided_slice %1 {offsets = [0, 0], sizes = [16, 8], strides = [1, 1]} : vector<16x96xf32> to vector<16x8xf32>
    %cst = arith.constant 0.353553385 : f32
    %11 = vector.broadcast %cst : f32 to vector<16x8xf32>
    %12 = arith.mulf %10, %11 : vector<16x8xf32>
    %13 = arith.truncf %12 : vector<16x8xf32> to vector<16x8xbf16>
    %14 = vector.extract_strided_slice %3 {offsets = [0, 32], sizes = [16, 8], strides = [1, 1]} : vector<16x96xf32> to vector<16x8xf32>
    %15 = arith.truncf %14 : vector<16x8xf32> to vector<16x8xbf16>
    %16 = vector.extract_strided_slice %3 {offsets = [0, 64], sizes = [16, 8], strides = [1, 1]} : vector<16x96xf32> to vector<16x8xf32>
    %17 = arith.truncf %16 : vector<16x8xf32> to vector<16x8xbf16>
    %cst_5 = arith.constant dense<0.000000e+00> : vector<16x16xf32>
    %18 = tpu.matmul %13, %15, %cst_5 {dimension_numbers = #tpu.dot_dimension_numbers<[1], [1], [0], [0], [0, 0, 1, 0], [], []>} : vector<16x8xbf16>, vector<16x8xbf16>, vector<16x16xf32> -> vector<16x16xf32>
    %cst_6 = arith.constant -1.000000e+30 : f32
    %19 = vector.broadcast %cst_6 : f32 to vector<16x16xf32>
    %20 = arith.select %9, %18, %19 : vector<16x16xi1>, vector<16x16xf32>
    %cst_7 = arith.constant dense<0xFF800000> : vector<16xf32>
    %21 = vector.multi_reduction <maximumf>, %20, %cst_7 [1] : vector<16x16xf32> to vector<16xf32>
    %22 = vector.shape_cast %21 : vector<16xf32> to vector<16x1xf32>
    %23 = vector.broadcast %22 : vector<16x1xf32> to vector<16x16xf32>
    %24 = arith.subf %20, %23 : vector<16x16xf32>
    %25 = math.exp %24 : vector<16x16xf32>
    %cst_8 = arith.constant dense<0.000000e+00> : vector<16xf32>
    %26 = vector.multi_reduction <add>, %25, %cst_8 [1] : vector<16x16xf32> to vector<16xf32>
    %27 = vector.shape_cast %26 : vector<16xf32> to vector<16x1xf32>
    %28 = arith.truncf %25 : vector<16x16xf32> to vector<16x16xbf16>
    %cst_9 = arith.constant dense<0.000000e+00> : vector<16x8xf32>
    %29 = tpu.matmul %28, %17, %cst_9 {dimension_numbers = #tpu.dot_dimension_numbers<[1], [0], [0], [1], [0, 0, 1, 1], [], []>} : vector<16x16xbf16>, vector<16x8xbf16>, vector<16x8xf32> -> vector<16x8xf32>
    %30 = tpu.reciprocal %27 {approx = true} : vector<16x1xf32> -> vector<16x1xf32>
    %31 = vector.broadcast %30 : vector<16x1xf32> to vector<16x8xf32>
    %32 = arith.mulf %29, %31 : vector<16x8xf32>
    %33 = vector.extract_strided_slice %1 {offsets = [0, 8], sizes = [16, 8], strides = [1, 1]} : vector<16x96xf32> to vector<16x8xf32>
    %cst_10 = arith.constant 0.353553385 : f32
    %34 = vector.broadcast %cst_10 : f32 to vector<16x8xf32>
    %35 = arith.mulf %33, %34 : vector<16x8xf32>
    %36 = arith.truncf %35 : vector<16x8xf32> to vector<16x8xbf16>
    %37 = vector.extract_strided_slice %3 {offsets = [0, 40], sizes = [16, 8], strides = [1, 1]} : vector<16x96xf32> to vector<16x8xf32>
    %38 = arith.truncf %37 : vector<16x8xf32> to vector<16x8xbf16>
    %39 = vector.extract_strided_slice %3 {offsets = [0, 72], sizes = [16, 8], strides = [1, 1]} : vector<16x96xf32> to vector<16x8xf32>
    %40 = arith.truncf %39 : vector<16x8xf32> to vector<16x8xbf16>
    %cst_11 = arith.constant dense<0.000000e+00> : vector<16x16xf32>
    %41 = tpu.matmul %36, %38, %cst_11 {dimension_numbers = #tpu.dot_dimension_numbers<[1], [1], [0], [0], [0, 0, 1, 0], [], []>} : vector<16x8xbf16>, vector<16x8xbf16>, vector<16x16xf32> -> vector<16x16xf32>
    %cst_12 = arith.constant -1.000000e+30 : f32
    %42 = vector.broadcast %cst_12 : f32 to vector<16x16xf32>
    %43 = arith.select %9, %41, %42 : vector<16x16xi1>, vector<16x16xf32>
    %cst_13 = arith.constant dense<0xFF800000> : vector<16xf32>
    %44 = vector.multi_reduction <maximumf>, %43, %cst_13 [1] : vector<16x16xf32> to vector<16xf32>
    %45 = vector.shape_cast %44 : vector<16xf32> to vector<16x1xf32>
    %46 = vector.broadcast %45 : vector<16x1xf32> to vector<16x16xf32>
    %47 = arith.subf %43, %46 : vector<16x16xf32>
    %48 = math.exp %47 : vector<16x16xf32>
    %cst_14 = arith.constant dense<0.000000e+00> : vector<16xf32>
    %49 = vector.multi_reduction <add>, %48, %cst_14 [1] : vector<16x16xf32> to vector<16xf32>
    %50 = vector.shape_cast %49 : vector<16xf32> to vector<16x1xf32>
    %51 = arith.truncf %48 : vector<16x16xf32> to vector<16x16xbf16>
    %cst_15 = arith.constant dense<0.000000e+00> : vector<16x8xf32>
    %52 = tpu.matmul %51, %40, %cst_15 {dimension_numbers = #tpu.dot_dimension_numbers<[1], [0], [0], [1], [0, 0, 1, 1], [], []>} : vector<16x16xbf16>, vector<16x8xbf16>, vector<16x8xf32> -> vector<16x8xf32>
    %53 = tpu.reciprocal %50 {approx = true} : vector<16x1xf32> -> vector<16x1xf32>
    %54 = vector.broadcast %53 : vector<16x1xf32> to vector<16x8xf32>
    %55 = arith.mulf %52, %54 : vector<16x8xf32>
    %56 = vector.extract_strided_slice %1 {offsets = [0, 16], sizes = [16, 8], strides = [1, 1]} : vector<16x96xf32> to vector<16x8xf32>
    %cst_16 = arith.constant 0.353553385 : f32
    %57 = vector.broadcast %cst_16 : f32 to vector<16x8xf32>
    %58 = arith.mulf %56, %57 : vector<16x8xf32>
    %59 = arith.truncf %58 : vector<16x8xf32> to vector<16x8xbf16>
    %60 = vector.extract_strided_slice %3 {offsets = [0, 48], sizes = [16, 8], strides = [1, 1]} : vector<16x96xf32> to vector<16x8xf32>
    %61 = arith.truncf %60 : vector<16x8xf32> to vector<16x8xbf16>
    %62 = vector.extract_strided_slice %3 {offsets = [0, 80], sizes = [16, 8], strides = [1, 1]} : vector<16x96xf32> to vector<16x8xf32>
    %63 = arith.truncf %62 : vector<16x8xf32> to vector<16x8xbf16>
    %cst_17 = arith.constant dense<0.000000e+00> : vector<16x16xf32>
    %64 = tpu.matmul %59, %61, %cst_17 {dimension_numbers = #tpu.dot_dimension_numbers<[1], [1], [0], [0], [0, 0, 1, 0], [], []>} : vector<16x8xbf16>, vector<16x8xbf16>, vector<16x16xf32> -> vector<16x16xf32>
    %cst_18 = arith.constant -1.000000e+30 : f32
    %65 = vector.broadcast %cst_18 : f32 to vector<16x16xf32>
    %66 = arith.select %9, %64, %65 : vector<16x16xi1>, vector<16x16xf32>
    %cst_19 = arith.constant dense<0xFF800000> : vector<16xf32>
    %67 = vector.multi_reduction <maximumf>, %66, %cst_19 [1] : vector<16x16xf32> to vector<16xf32>
    %68 = vector.shape_cast %67 : vector<16xf32> to vector<16x1xf32>
    %69 = vector.broadcast %68 : vector<16x1xf32> to vector<16x16xf32>
    %70 = arith.subf %66, %69 : vector<16x16xf32>
    %71 = math.exp %70 : vector<16x16xf32>
    %cst_20 = arith.constant dense<0.000000e+00> : vector<16xf32>
    %72 = vector.multi_reduction <add>, %71, %cst_20 [1] : vector<16x16xf32> to vector<16xf32>
    %73 = vector.shape_cast %72 : vector<16xf32> to vector<16x1xf32>
    %74 = arith.truncf %71 : vector<16x16xf32> to vector<16x16xbf16>
    %cst_21 = arith.constant dense<0.000000e+00> : vector<16x8xf32>
    %75 = tpu.matmul %74, %63, %cst_21 {dimension_numbers = #tpu.dot_dimension_numbers<[1], [0], [0], [1], [0, 0, 1, 1], [], []>} : vector<16x16xbf16>, vector<16x8xbf16>, vector<16x8xf32> -> vector<16x8xf32>
    %76 = tpu.reciprocal %73 {approx = true} : vector<16x1xf32> -> vector<16x1xf32>
    %77 = vector.broadcast %76 : vector<16x1xf32> to vector<16x8xf32>
    %78 = arith.mulf %75, %77 : vector<16x8xf32>
    %79 = vector.extract_strided_slice %1 {offsets = [0, 24], sizes = [16, 8], strides = [1, 1]} : vector<16x96xf32> to vector<16x8xf32>
    %cst_22 = arith.constant 0.353553385 : f32
    %80 = vector.broadcast %cst_22 : f32 to vector<16x8xf32>
    %81 = arith.mulf %79, %80 : vector<16x8xf32>
    %82 = arith.truncf %81 : vector<16x8xf32> to vector<16x8xbf16>
    %83 = vector.extract_strided_slice %3 {offsets = [0, 56], sizes = [16, 8], strides = [1, 1]} : vector<16x96xf32> to vector<16x8xf32>
    %84 = arith.truncf %83 : vector<16x8xf32> to vector<16x8xbf16>
    %85 = vector.extract_strided_slice %3 {offsets = [0, 88], sizes = [16, 8], strides = [1, 1]} : vector<16x96xf32> to vector<16x8xf32>
    %86 = arith.truncf %85 : vector<16x8xf32> to vector<16x8xbf16>
    %cst_23 = arith.constant dense<0.000000e+00> : vector<16x16xf32>
    %87 = tpu.matmul %82, %84, %cst_23 {dimension_numbers = #tpu.dot_dimension_numbers<[1], [1], [0], [0], [0, 0, 1, 0], [], []>} : vector<16x8xbf16>, vector<16x8xbf16>, vector<16x16xf32> -> vector<16x16xf32>
    %cst_24 = arith.constant -1.000000e+30 : f32
    %88 = vector.broadcast %cst_24 : f32 to vector<16x16xf32>
    %89 = arith.select %9, %87, %88 : vector<16x16xi1>, vector<16x16xf32>
    %cst_25 = arith.constant dense<0xFF800000> : vector<16xf32>
    %90 = vector.multi_reduction <maximumf>, %89, %cst_25 [1] : vector<16x16xf32> to vector<16xf32>
    %91 = vector.shape_cast %90 : vector<16xf32> to vector<16x1xf32>
    %92 = vector.broadcast %91 : vector<16x1xf32> to vector<16x16xf32>
    %93 = arith.subf %89, %92 : vector<16x16xf32>
    %94 = math.exp %93 : vector<16x16xf32>
    %cst_26 = arith.constant dense<0.000000e+00> : vector<16xf32>
    %95 = vector.multi_reduction <add>, %94, %cst_26 [1] : vector<16x16xf32> to vector<16xf32>
    %96 = vector.shape_cast %95 : vector<16xf32> to vector<16x1xf32>
    %97 = arith.truncf %94 : vector<16x16xf32> to vector<16x16xbf16>
    %cst_27 = arith.constant dense<0.000000e+00> : vector<16x8xf32>
    %98 = tpu.matmul %97, %86, %cst_27 {dimension_numbers = #tpu.dot_dimension_numbers<[1], [0], [0], [1], [0, 0, 1, 1], [], []>} : vector<16x16xbf16>, vector<16x8xbf16>, vector<16x8xf32> -> vector<16x8xf32>
    %99 = tpu.reciprocal %96 {approx = true} : vector<16x1xf32> -> vector<16x1xf32>
    %100 = vector.broadcast %99 : vector<16x1xf32> to vector<16x8xf32>
    %101 = arith.mulf %98, %100 : vector<16x8xf32>
    %102 = tpu.concatenate %32, %55, %78, %101 in 1 : vector<16x8xf32>, vector<16x8xf32>, vector<16x8xf32>, vector<16x8xf32> -> vector<16x32xf32>
    %103 = arith.truncf %102 : vector<16x32xf32> to vector<16x32xbf16>
    %c0_28 = arith.constant 0 : index
    %c0_29 = arith.constant 0 : index
    %104 = vector.load %arg4[%c0_28, %c0_29] : memref<32x32xbf16, #tpu.memory_space<vmem>>, vector<32x32xbf16>
    %cst_30 = arith.constant dense<0.000000e+00> : vector<16x32xf32>
    %105 = tpu.matmul %103, %104, %cst_30 {dimension_numbers = #tpu.dot_dimension_numbers<[1], [0], [0], [1], [0, 0, 1, 1], [], []>} : vector<16x32xbf16>, vector<32x32xbf16>, vector<16x32xf32> -> vector<16x32xf32>
    %c0_31 = arith.constant 0 : index
    %c0_32 = arith.constant 0 : index
    %106 = vector.load %arg5[%c0_31, %c0_32] : memref<1x32xf32, #tpu.memory_space<vmem>>, vector<1x32xf32>
    %107 = vector.broadcast %106 : vector<1x32xf32> to vector<16x32xf32>
    %108 = arith.addf %105, %107 : vector<16x32xf32>
    %c0_33 = arith.constant 0 : index
    %c0_34 = arith.constant 0 : index
    %c0_35 = arith.constant 0 : index
    %109 = vector.load %arg6[%c0_33, %c0_34, %c0_35] : memref<1x16x32xf32, #tpu.memory_space<vmem>>, vector<1x16x32xf32>
    %110 = vector.shape_cast %109 : vector<1x16x32xf32> to vector<16x32xf32>
    %111 = arith.addf %110, %108 : vector<16x32xf32>
    %c0_36 = arith.constant 0 : index
    %c0_37 = arith.constant 0 : index
    %c0_38 = arith.constant 0 : index
    %112 = vector.load %arg7[%c0_36, %c0_37, %c0_38] : memref<1x16x32xf32, #tpu.memory_space<vmem>>, vector<1x16x32xf32>
    %113 = vector.shape_cast %112 : vector<1x16x32xf32> to vector<16x32xf32>
    %114 = vector.shape_cast %111 : vector<16x32xf32> to vector<1x16x32xf32>
    tpu.vector_store %arg7[%c0_36, %c0_37, %c0_38], %114 {strides = array<i32>} : memref<1x16x32xf32, #tpu.memory_space<vmem>>, vector<1x16x32xf32>,
    return
  }
  func.func @transform_0(%arg0: i32, %arg1: i32) -> (i32, i32, i32) {
    %c0_i32 = arith.constant 0 : i32
    %c0_i32_0 = arith.constant 0 : i32
    return %arg0, %arg1, %c0_i32 : i32, i32, i32
  }
  func.func @transform_1(%arg0: i32, %arg1: i32) -> (i32, i32, i32) {
    %c0_i32 = arith.constant 0 : i32
    %c0_i32_0 = arith.constant 0 : i32
    %c0_i32_1 = arith.constant 0 : i32
    return %arg0, %c0_i32, %c0_i32_0 : i32, i32, i32
  }
  func.func @transform_2(%arg0: i32, %arg1: i32) -> (i32, i32) {
    %c0_i32 = arith.constant 0 : i32
    %c0_i32_0 = arith.constant 0 : i32
    %c0_i32_1 = arith.constant 0 : i32
    return %c0_i32, %c0_i32_0 : i32, i32
  }
  func.func @transform_3(%arg0: i32, %arg1: i32) -> (i32, i32) {
    %c0_i32 = arith.constant 0 : i32
    %c0_i32_0 = arith.constant 0 : i32
    %c0_i32_1 = arith.constant 0 : i32
    return %c0_i32, %c0_i32_0 : i32, i32
  }
  func.func @transform_4(%arg0: i32, %arg1: i32) -> (i32, i32, i32) {
    %c0_i32 = arith.constant 0 : i32
    %c0_i32_0 = arith.constant 0 : i32
    return %arg0, %arg1, %c0_i32 : i32, i32, i32
  }
  func.func @transform_5(%arg0: i32, %arg1: i32) -> (i32, i32, i32) {
    %c0_i32 = arith.constant 0 : i32
    %c0_i32_0 = arith.constant 0 : i32
    return %arg0, %arg1, %c0_i32 : i32, i32, i32
  }
}

module attributes {stable_mosaic.version = 11 : i64} {
  func.func @_ln_linear_kernel(%arg0: i32, %arg1: memref<32x32xf32, #tpu.memory_space<vmem>>, %arg2: memref<1x32xf32, #tpu.memory_space<vmem>>, %arg3: memref<1x32xf32, #tpu.memory_space<vmem>>, %arg4: memref<32x96xbf16, #tpu.memory_space<vmem>>, %arg5: memref<1x96xf32, #tpu.memory_space<vmem>>, %arg6: memref<32x96xf32, #tpu.memory_space<vmem>>) attributes {dimension_semantics = [#tpu.dimension_semantics<parallel>], iteration_bounds = array<i64: 1>, scalar_prefetch = 0 : i64, scratch_operands = 0 : i64, tpu.core_type = #tpu.core_type<tc>, window_params = [{transform_indices = @transform_0, window_bounds = array<i64: 32, 32>}, {pipeline_mode = #tpu.pipeline_mode<synchronous>, transform_indices = @transform_1, window_bounds = array<i64: 1, 32>}, {pipeline_mode = #tpu.pipeline_mode<synchronous>, transform_indices = @transform_2, window_bounds = array<i64: 1, 32>}, {pipeline_mode = #tpu.pipeline_mode<synchronous>, transform_indices = @transform_3, window_bounds = array<i64: 32, 96>}, {pipeline_mode = #tpu.pipeline_mode<synchronous>, transform_indices = @transform_4, window_bounds = array<i64: 1, 96>}, {transform_indices = @transform_5, window_bounds = array<i64: 32, 96>}]} {
    %c0 = arith.constant 0 : index
    %c0_0 = arith.constant 0 : index
    %0 = vector.load %arg1[%c0, %c0_0] : memref<32x32xf32, #tpu.memory_space<vmem>>, vector<32x32xf32>
    %c0_1 = arith.constant 0 : index
    %c0_2 = arith.constant 0 : index
    %1 = vector.load %arg2[%c0_1, %c0_2] : memref<1x32xf32, #tpu.memory_space<vmem>>, vector<1x32xf32>
    %c0_3 = arith.constant 0 : index
    %c0_4 = arith.constant 0 : index
    %2 = vector.load %arg3[%c0_3, %c0_4] : memref<1x32xf32, #tpu.memory_space<vmem>>, vector<1x32xf32>
    %cst = arith.constant dense<0.000000e+00> : vector<32xf32>
    %3 = vector.multi_reduction <add>, %0, %cst [1] : vector<32x32xf32> to vector<32xf32>
    %4 = vector.shape_cast %3 : vector<32xf32> to vector<32x1xf32>
    %cst_5 = arith.constant 3.200000e+01 : f32
    %5 = vector.broadcast %cst_5 : f32 to vector<32x1xf32>
    %6 = arith.divf %4, %5 : vector<32x1xf32>
    %7 = vector.broadcast %6 : vector<32x1xf32> to vector<32x32xf32>
    %8 = arith.subf %0, %7 : vector<32x32xf32>
    %9 = arith.mulf %8, %8 : vector<32x32xf32>
    %cst_6 = arith.constant dense<0.000000e+00> : vector<32xf32>
    %10 = vector.multi_reduction <add>, %9, %cst_6 [1] : vector<32x32xf32> to vector<32xf32>
    %11 = vector.shape_cast %10 : vector<32xf32> to vector<32x1xf32>
    %cst_7 = arith.constant 3.200000e+01 : f32
    %12 = vector.broadcast %cst_7 : f32 to vector<32x1xf32>
    %13 = arith.divf %11, %12 : vector<32x1xf32>
    %14 = vector.broadcast %6 : vector<32x1xf32> to vector<32x32xf32>
    %15 = arith.subf %0, %14 : vector<32x32xf32>
    %cst_8 = arith.constant 9.99999974E-6 : f32
    %16 = vector.broadcast %cst_8 : f32 to vector<32x1xf32>
    %17 = arith.addf %13, %16 : vector<32x1xf32>
    %18 = math.rsqrt %17 : vector<32x1xf32>
    %19 = vector.broadcast %18 : vector<32x1xf32> to vector<32x32xf32>
    %20 = arith.mulf %15, %19 : vector<32x32xf32>
    %21 = vector.broadcast %1 : vector<1x32xf32> to vector<32x32xf32>
    %22 = arith.mulf %20, %21 : vector<32x32xf32>
    %23 = vector.broadcast %2 : vector<1x32xf32> to vector<32x32xf32>
    %24 = arith.addf %22, %23 : vector<32x32xf32>
    %25 = arith.truncf %24 : vector<32x32xf32> to vector<32x32xbf16>
    %c0_9 = arith.constant 0 : index
    %c0_10 = arith.constant 0 : index
    %26 = vector.load %arg4[%c0_9, %c0_10] : memref<32x96xbf16, #tpu.memory_space<vmem>>, vector<32x96xbf16>
    %cst_11 = arith.constant dense<0.000000e+00> : vector<32x96xf32>
    %27 = tpu.matmul %25, %26, %cst_11 {dimension_numbers = #tpu.dot_dimension_numbers<[1], [0], [0], [1], [0, 0, 1, 1], [], []>} : vector<32x32xbf16>, vector<32x96xbf16>, vector<32x96xf32> -> vector<32x96xf32>
    %c0_12 = arith.constant 0 : index
    %c0_13 = arith.constant 0 : index
    %28 = vector.load %arg5[%c0_12, %c0_13] : memref<1x96xf32, #tpu.memory_space<vmem>>, vector<1x96xf32>
    %29 = vector.broadcast %28 : vector<1x96xf32> to vector<32x96xf32>
    %30 = arith.addf %27, %29 : vector<32x96xf32>
    %c0_14 = arith.constant 0 : index
    %c0_15 = arith.constant 0 : index
    %31 = vector.load %arg6[%c0_14, %c0_15] : memref<32x96xf32, #tpu.memory_space<vmem>>, vector<32x96xf32>
    tpu.vector_store %arg6[%c0_14, %c0_15], %30 {strides = array<i32>} : memref<32x96xf32, #tpu.memory_space<vmem>>, vector<32x96xf32>,
    return
  }
  func.func @transform_0(%arg0: i32) -> (i32, i32) {
    %c0_i32 = arith.constant 0 : i32
    %c0_i32_0 = arith.constant 0 : i32
    return %arg0, %c0_i32 : i32, i32
  }
  func.func @transform_1(%arg0: i32) -> (i32, i32) {
    %c0_i32 = arith.constant 0 : i32
    %c0_i32_0 = arith.constant 0 : i32
    %c0_i32_1 = arith.constant 0 : i32
    return %c0_i32, %c0_i32_0 : i32, i32
  }
  func.func @transform_2(%arg0: i32) -> (i32, i32) {
    %c0_i32 = arith.constant 0 : i32
    %c0_i32_0 = arith.constant 0 : i32
    %c0_i32_1 = arith.constant 0 : i32
    return %c0_i32, %c0_i32_0 : i32, i32
  }
  func.func @transform_3(%arg0: i32) -> (i32, i32) {
    %c0_i32 = arith.constant 0 : i32
    %c0_i32_0 = arith.constant 0 : i32
    %c0_i32_1 = arith.constant 0 : i32
    return %c0_i32, %c0_i32_0 : i32, i32
  }
  func.func @transform_4(%arg0: i32) -> (i32, i32) {
    %c0_i32 = arith.constant 0 : i32
    %c0_i32_0 = arith.constant 0 : i32
    %c0_i32_1 = arith.constant 0 : i32
    return %c0_i32, %c0_i32_0 : i32, i32
  }
  func.func @transform_5(%arg0: i32) -> (i32, i32) {
    %c0_i32 = arith.constant 0 : i32
    %c0_i32_0 = arith.constant 0 : i32
    return %arg0, %c0_i32 : i32, i32
  }
}

module attributes {stable_mosaic.version = 11 : i64} {
  func.func @_ln_mlp_residual_kernel(%arg0: i32, %arg1: memref<32x32xf32, #tpu.memory_space<vmem>>, %arg2: memref<1x32xf32, #tpu.memory_space<vmem>>, %arg3: memref<1x32xf32, #tpu.memory_space<vmem>>, %arg4: memref<32x128xbf16, #tpu.memory_space<vmem>>, %arg5: memref<1x128xf32, #tpu.memory_space<vmem>>, %arg6: memref<128x32xbf16, #tpu.memory_space<vmem>>, %arg7: memref<1x32xf32, #tpu.memory_space<vmem>>, %arg8: memref<32x32xf32, #tpu.memory_space<vmem>>) attributes {dimension_semantics = [#tpu.dimension_semantics<parallel>], iteration_bounds = array<i64: 1>, scalar_prefetch = 0 : i64, scratch_operands = 0 : i64, tpu.core_type = #tpu.core_type<tc>, window_params = [{transform_indices = @transform_0, window_bounds = array<i64: 32, 32>}, {pipeline_mode = #tpu.pipeline_mode<synchronous>, transform_indices = @transform_1, window_bounds = array<i64: 1, 32>}, {pipeline_mode = #tpu.pipeline_mode<synchronous>, transform_indices = @transform_2, window_bounds = array<i64: 1, 32>}, {pipeline_mode = #tpu.pipeline_mode<synchronous>, transform_indices = @transform_3, window_bounds = array<i64: 32, 128>}, {pipeline_mode = #tpu.pipeline_mode<synchronous>, transform_indices = @transform_4, window_bounds = array<i64: 1, 128>}, {pipeline_mode = #tpu.pipeline_mode<synchronous>, transform_indices = @transform_5, window_bounds = array<i64: 128, 32>}, {pipeline_mode = #tpu.pipeline_mode<synchronous>, transform_indices = @transform_6, window_bounds = array<i64: 1, 32>}, {transform_indices = @transform_7, window_bounds = array<i64: 32, 32>}]} {
    %c0 = arith.constant 0 : index
    %c0_0 = arith.constant 0 : index
    %0 = vector.load %arg1[%c0, %c0_0] : memref<32x32xf32, #tpu.memory_space<vmem>>, vector<32x32xf32>
    %c0_1 = arith.constant 0 : index
    %c0_2 = arith.constant 0 : index
    %1 = vector.load %arg2[%c0_1, %c0_2] : memref<1x32xf32, #tpu.memory_space<vmem>>, vector<1x32xf32>
    %c0_3 = arith.constant 0 : index
    %c0_4 = arith.constant 0 : index
    %2 = vector.load %arg3[%c0_3, %c0_4] : memref<1x32xf32, #tpu.memory_space<vmem>>, vector<1x32xf32>
    %cst = arith.constant dense<0.000000e+00> : vector<32xf32>
    %3 = vector.multi_reduction <add>, %0, %cst [1] : vector<32x32xf32> to vector<32xf32>
    %4 = vector.shape_cast %3 : vector<32xf32> to vector<32x1xf32>
    %cst_5 = arith.constant 3.200000e+01 : f32
    %5 = vector.broadcast %cst_5 : f32 to vector<32x1xf32>
    %6 = arith.divf %4, %5 : vector<32x1xf32>
    %7 = vector.broadcast %6 : vector<32x1xf32> to vector<32x32xf32>
    %8 = arith.subf %0, %7 : vector<32x32xf32>
    %9 = arith.mulf %8, %8 : vector<32x32xf32>
    %cst_6 = arith.constant dense<0.000000e+00> : vector<32xf32>
    %10 = vector.multi_reduction <add>, %9, %cst_6 [1] : vector<32x32xf32> to vector<32xf32>
    %11 = vector.shape_cast %10 : vector<32xf32> to vector<32x1xf32>
    %cst_7 = arith.constant 3.200000e+01 : f32
    %12 = vector.broadcast %cst_7 : f32 to vector<32x1xf32>
    %13 = arith.divf %11, %12 : vector<32x1xf32>
    %14 = vector.broadcast %6 : vector<32x1xf32> to vector<32x32xf32>
    %15 = arith.subf %0, %14 : vector<32x32xf32>
    %cst_8 = arith.constant 9.99999974E-6 : f32
    %16 = vector.broadcast %cst_8 : f32 to vector<32x1xf32>
    %17 = arith.addf %13, %16 : vector<32x1xf32>
    %18 = math.rsqrt %17 : vector<32x1xf32>
    %19 = vector.broadcast %18 : vector<32x1xf32> to vector<32x32xf32>
    %20 = arith.mulf %15, %19 : vector<32x32xf32>
    %21 = vector.broadcast %1 : vector<1x32xf32> to vector<32x32xf32>
    %22 = arith.mulf %20, %21 : vector<32x32xf32>
    %23 = vector.broadcast %2 : vector<1x32xf32> to vector<32x32xf32>
    %24 = arith.addf %22, %23 : vector<32x32xf32>
    %25 = arith.truncf %24 : vector<32x32xf32> to vector<32x32xbf16>
    %c0_9 = arith.constant 0 : index
    %c0_10 = arith.constant 0 : index
    %26 = vector.load %arg4[%c0_9, %c0_10] : memref<32x128xbf16, #tpu.memory_space<vmem>>, vector<32x128xbf16>
    %cst_11 = arith.constant dense<0.000000e+00> : vector<32x128xf32>
    %27 = tpu.matmul %25, %26, %cst_11 {dimension_numbers = #tpu.dot_dimension_numbers<[1], [0], [0], [1], [0, 0, 1, 1], [], []>} : vector<32x32xbf16>, vector<32x128xbf16>, vector<32x128xf32> -> vector<32x128xf32>
    %c0_12 = arith.constant 0 : index
    %c0_13 = arith.constant 0 : index
    %28 = vector.load %arg5[%c0_12, %c0_13] : memref<1x128xf32, #tpu.memory_space<vmem>>, vector<1x128xf32>
    %29 = vector.broadcast %28 : vector<1x128xf32> to vector<32x128xf32>
    %30 = arith.addf %27, %29 : vector<32x128xf32>
    %cst_14 = arith.constant 5.000000e-01 : f32
    %31 = vector.broadcast %cst_14 : f32 to vector<32x128xf32>
    %32 = arith.mulf %31, %30 : vector<32x128xf32>
    %cst_15 = arith.constant 4.471500e-02 : f32
    %33 = vector.broadcast %cst_15 : f32 to vector<32x128xf32>
    %34 = arith.mulf %33, %30 : vector<32x128xf32>
    %35 = arith.mulf %34, %30 : vector<32x128xf32>
    %36 = arith.mulf %35, %30 : vector<32x128xf32>
    %37 = arith.addf %30, %36 : vector<32x128xf32>
    %cst_16 = arith.constant 0.797884583 : f32
    %38 = vector.broadcast %cst_16 : f32 to vector<32x128xf32>
    %39 = arith.mulf %38, %37 : vector<32x128xf32>
    %40 = math.tanh %39 : vector<32x128xf32>
    %cst_17 = arith.constant 1.000000e+00 : f32
    %41 = vector.broadcast %cst_17 : f32 to vector<32x128xf32>
    %42 = arith.addf %41, %40 : vector<32x128xf32>
    %43 = arith.mulf %32, %42 : vector<32x128xf32>
    %44 = arith.truncf %43 : vector<32x128xf32> to vector<32x128xbf16>
    %c0_18 = arith.constant 0 : index
    %c0_19 = arith.constant 0 : index
    %45 = vector.load %arg6[%c0_18, %c0_19] : memref<128x32xbf16, #tpu.memory_space<vmem>>, vector<128x32xbf16>
    %cst_20 = arith.constant dense<0.000000e+00> : vector<32x32xf32>
    %46 = tpu.matmul %44, %45, %cst_20 {dimension_numbers = #tpu.dot_dimension_numbers<[1], [0], [0], [1], [0, 0, 1, 1], [], []>} : vector<32x128xbf16>, vector<128x32xbf16>, vector<32x32xf32> -> vector<32x32xf32>
    %c0_21 = arith.constant 0 : index
    %c0_22 = arith.constant 0 : index
    %47 = vector.load %arg7[%c0_21, %c0_22] : memref<1x32xf32, #tpu.memory_space<vmem>>, vector<1x32xf32>
    %48 = vector.broadcast %47 : vector<1x32xf32> to vector<32x32xf32>
    %49 = arith.addf %46, %48 : vector<32x32xf32>
    %50 = arith.addf %0, %49 : vector<32x32xf32>
    %c0_23 = arith.constant 0 : index
    %c0_24 = arith.constant 0 : index
    %51 = vector.load %arg8[%c0_23, %c0_24] : memref<32x32xf32, #tpu.memory_space<vmem>>, vector<32x32xf32>
    tpu.vector_store %arg8[%c0_23, %c0_24], %50 {strides = array<i32>} : memref<32x32xf32, #tpu.memory_space<vmem>>, vector<32x32xf32>,
    return
  }
  func.func @transform_0(%arg0: i32) -> (i32, i32) {
    %c0_i32 = arith.constant 0 : i32
    %c0_i32_0 = arith.constant 0 : i32
    return %arg0, %c0_i32 : i32, i32
  }
  func.func @transform_1(%arg0: i32) -> (i32, i32) {
    %c0_i32 = arith.constant 0 : i32
    %c0_i32_0 = arith.constant 0 : i32
    %c0_i32_1 = arith.constant 0 : i32
    return %c0_i32, %c0_i32_0 : i32, i32
  }
  func.func @transform_2(%arg0: i32) -> (i32, i32) {
    %c0_i32 = arith.constant 0 : i32
    %c0_i32_0 = arith.constant 0 : i32
    %c0_i32_1 = arith.constant 0 : i32
    return %c0_i32, %c0_i32_0 : i32, i32
  }
  func.func @transform_3(%arg0: i32) -> (i32, i32) {
    %c0_i32 = arith.constant 0 : i32
    %c0_i32_0 = arith.constant 0 : i32
    %c0_i32_1 = arith.constant 0 : i32
    return %c0_i32, %c0_i32_0 : i32, i32
  }
  func.func @transform_4(%arg0: i32) -> (i32, i32) {
    %c0_i32 = arith.constant 0 : i32
    %c0_i32_0 = arith.constant 0 : i32
    %c0_i32_1 = arith.constant 0 : i32
    return %c0_i32, %c0_i32_0 : i32, i32
  }
  func.func @transform_5(%arg0: i32) -> (i32, i32) {
    %c0_i32 = arith.constant 0 : i32
    %c0_i32_0 = arith.constant 0 : i32
    %c0_i32_1 = arith.constant 0 : i32
    return %c0_i32, %c0_i32_0 : i32, i32
  }
  func.func @transform_6(%arg0: i32) -> (i32, i32) {
    %c0_i32 = arith.constant 0 : i32
    %c0_i32_0 = arith.constant 0 : i32
    %c0_i32_1 = arith.constant 0 : i32
    return %c0_i32, %c0_i32_0 : i32, i32
  }
  func.func @transform_7(%arg0: i32) -> (i32, i32) {
    %c0_i32 = arith.constant 0 : i32
    %c0_i32_0 = arith.constant 0 : i32
    return %arg0, %c0_i32 : i32, i32
  }
}

module attributes {stable_mosaic.version = 11 : i64} {
  func.func @_ln_linear_kernel(%arg0: i32, %arg1: memref<16x32xf32, #tpu.memory_space<vmem>>, %arg2: memref<1x32xf32, #tpu.memory_space<vmem>>, %arg3: memref<1x32xf32, #tpu.memory_space<vmem>>, %arg4: memref<32x128xbf16, #tpu.memory_space<vmem>>, %arg5: memref<1x128xf32, #tpu.memory_space<vmem>>, %arg6: memref<16x128xf32, #tpu.memory_space<vmem>>) attributes {dimension_semantics = [#tpu.dimension_semantics<parallel>], iteration_bounds = array<i64: 1>, scalar_prefetch = 0 : i64, scratch_operands = 0 : i64, tpu.core_type = #tpu.core_type<tc>, window_params = [{transform_indices = @transform_0, window_bounds = array<i64: 16, 32>}, {pipeline_mode = #tpu.pipeline_mode<synchronous>, transform_indices = @transform_1, window_bounds = array<i64: 1, 32>}, {pipeline_mode = #tpu.pipeline_mode<synchronous>, transform_indices = @transform_2, window_bounds = array<i64: 1, 32>}, {pipeline_mode = #tpu.pipeline_mode<synchronous>, transform_indices = @transform_3, window_bounds = array<i64: 32, 128>}, {pipeline_mode = #tpu.pipeline_mode<synchronous>, transform_indices = @transform_4, window_bounds = array<i64: 1, 128>}, {transform_indices = @transform_5, window_bounds = array<i64: 16, 128>}]} {
    %c0 = arith.constant 0 : index
    %c0_0 = arith.constant 0 : index
    %0 = vector.load %arg1[%c0, %c0_0] : memref<16x32xf32, #tpu.memory_space<vmem>>, vector<16x32xf32>
    %c0_1 = arith.constant 0 : index
    %c0_2 = arith.constant 0 : index
    %1 = vector.load %arg2[%c0_1, %c0_2] : memref<1x32xf32, #tpu.memory_space<vmem>>, vector<1x32xf32>
    %c0_3 = arith.constant 0 : index
    %c0_4 = arith.constant 0 : index
    %2 = vector.load %arg3[%c0_3, %c0_4] : memref<1x32xf32, #tpu.memory_space<vmem>>, vector<1x32xf32>
    %cst = arith.constant dense<0.000000e+00> : vector<16xf32>
    %3 = vector.multi_reduction <add>, %0, %cst [1] : vector<16x32xf32> to vector<16xf32>
    %4 = vector.shape_cast %3 : vector<16xf32> to vector<16x1xf32>
    %cst_5 = arith.constant 3.200000e+01 : f32
    %5 = vector.broadcast %cst_5 : f32 to vector<16x1xf32>
    %6 = arith.divf %4, %5 : vector<16x1xf32>
    %7 = vector.broadcast %6 : vector<16x1xf32> to vector<16x32xf32>
    %8 = arith.subf %0, %7 : vector<16x32xf32>
    %9 = arith.mulf %8, %8 : vector<16x32xf32>
    %cst_6 = arith.constant dense<0.000000e+00> : vector<16xf32>
    %10 = vector.multi_reduction <add>, %9, %cst_6 [1] : vector<16x32xf32> to vector<16xf32>
    %11 = vector.shape_cast %10 : vector<16xf32> to vector<16x1xf32>
    %cst_7 = arith.constant 3.200000e+01 : f32
    %12 = vector.broadcast %cst_7 : f32 to vector<16x1xf32>
    %13 = arith.divf %11, %12 : vector<16x1xf32>
    %14 = vector.broadcast %6 : vector<16x1xf32> to vector<16x32xf32>
    %15 = arith.subf %0, %14 : vector<16x32xf32>
    %cst_8 = arith.constant 9.99999974E-6 : f32
    %16 = vector.broadcast %cst_8 : f32 to vector<16x1xf32>
    %17 = arith.addf %13, %16 : vector<16x1xf32>
    %18 = math.rsqrt %17 : vector<16x1xf32>
    %19 = vector.broadcast %18 : vector<16x1xf32> to vector<16x32xf32>
    %20 = arith.mulf %15, %19 : vector<16x32xf32>
    %21 = vector.broadcast %1 : vector<1x32xf32> to vector<16x32xf32>
    %22 = arith.mulf %20, %21 : vector<16x32xf32>
    %23 = vector.broadcast %2 : vector<1x32xf32> to vector<16x32xf32>
    %24 = arith.addf %22, %23 : vector<16x32xf32>
    %25 = arith.truncf %24 : vector<16x32xf32> to vector<16x32xbf16>
    %c0_9 = arith.constant 0 : index
    %c0_10 = arith.constant 0 : index
    %26 = vector.load %arg4[%c0_9, %c0_10] : memref<32x128xbf16, #tpu.memory_space<vmem>>, vector<32x128xbf16>
    %cst_11 = arith.constant dense<0.000000e+00> : vector<16x128xf32>
    %27 = tpu.matmul %25, %26, %cst_11 {dimension_numbers = #tpu.dot_dimension_numbers<[1], [0], [0], [1], [0, 0, 1, 1], [], []>} : vector<16x32xbf16>, vector<32x128xbf16>, vector<16x128xf32> -> vector<16x128xf32>
    %c0_12 = arith.constant 0 : index
    %c0_13 = arith.constant 0 : index
    %28 = vector.load %arg5[%c0_12, %c0_13] : memref<1x128xf32, #tpu.memory_space<vmem>>, vector<1x128xf32>
    %29 = vector.broadcast %28 : vector<1x128xf32> to vector<16x128xf32>
    %30 = arith.addf %27, %29 : vector<16x128xf32>
    %c0_14 = arith.constant 0 : index
    %c0_15 = arith.constant 0 : index
    %31 = vector.load %arg6[%c0_14, %c0_15] : memref<16x128xf32, #tpu.memory_space<vmem>>, vector<16x128xf32>
    tpu.vector_store %arg6[%c0_14, %c0_15], %30 {strides = array<i32>} : memref<16x128xf32, #tpu.memory_space<vmem>>, vector<16x128xf32>,
    return
  }
  func.func @transform_0(%arg0: i32) -> (i32, i32) {
    %c0_i32 = arith.constant 0 : i32
    %c0_i32_0 = arith.constant 0 : i32
    return %arg0, %c0_i32 : i32, i32
  }
  func.func @transform_1(%arg0: i32) -> (i32, i32) {
    %c0_i32 = arith.constant 0 : i32
    %c0_i32_0 = arith.constant 0 : i32
    %c0_i32_1 = arith.constant 0 : i32
    return %c0_i32, %c0_i32_0 : i32, i32
  }
  func.func @transform_2(%arg0: i32) -> (i32, i32) {
    %c0_i32 = arith.constant 0 : i32
    %c0_i32_0 = arith.constant 0 : i32
    %c0_i32_1 = arith.constant 0 : i32
    return %c0_i32, %c0_i32_0 : i32, i32
  }
  func.func @transform_3(%arg0: i32) -> (i32, i32) {
    %c0_i32 = arith.constant 0 : i32
    %c0_i32_0 = arith.constant 0 : i32
    %c0_i32_1 = arith.constant 0 : i32
    return %c0_i32, %c0_i32_0 : i32, i32
  }
  func.func @transform_4(%arg0: i32) -> (i32, i32) {
    %c0_i32 = arith.constant 0 : i32
    %c0_i32_0 = arith.constant 0 : i32
    %c0_i32_1 = arith.constant 0 : i32
    return %c0_i32, %c0_i32_0 : i32, i32
  }
  func.func @transform_5(%arg0: i32) -> (i32, i32) {
    %c0_i32 = arith.constant 0 : i32
    %c0_i32_0 = arith.constant 0 : i32
    return %arg0, %c0_i32 : i32, i32
  }
}

</mosaic_0001>

<llo_original>
// kernel: transformer_forward.9
$region0: #{transformer_forward.9}
  #allocation0 [shape = 'u32[]', space=smem, size = 0x4, offset = 0x4, fixed_abs, tag = 'smem constant byte address 0x4 - core index']
  #allocation1 [shape = 'u32[144,128]{1,0:T(1,128)}', space=vmem, size = 0x12000, scoped, tag = 'internal scratch']
  %s0 = inlined_call_operand.vmem [shape: f32[32,32], index: 0, kind: input, shape index: {}]
  %s1 = inlined_call_operand.vmem [shape: f32[1,32], index: 1, kind: input, shape index: {}]
  %s2 = inlined_call_operand.vmem [shape: f32[1,32], index: 2, kind: input, shape index: {}]
  %s3 = inlined_call_operand.vmem [shape: bf16[32,96], index: 3, kind: input, shape index: {}]
  %s4 = inlined_call_operand.vmem [shape: f32[1,96], index: 4, kind: input, shape index: {}]
  %s5 = inlined_call_operand.vmem [shape: f32[32,96], index: 5, kind: output, shape index: {}]
  %s6 = sld [smem:[#allocation0]]
  $region30: #{transformer_forward.9} parent=0
    _
  %s8 = ssub.s32 1, %s6
  %s9 = scalar_select 0, %s8, %s6
  // Predicated region
  $region2: #{transformer_forward.9} parent=0 // pred_check
    _
  $region3: #{transformer_forward.9} parent=0 // pred_check_branch
    %11 = sbr.rel (0) target = $region5
  $region4: #{transformer_forward.9} parent=0 // pred_region
    _
  $region5: #{transformer_forward.9} parent=0 // pred_fallthru
    _
  // Predicated region
  $region6: #{transformer_forward.9} parent=0 // pred_check
    _
  $region7: #{transformer_forward.9} parent=0 // pred_check_branch
    %13 = sbr.rel (0) target = $region9
  $region8: #{transformer_forward.9} parent=0 // pred_region
    _
  $region9: #{transformer_forward.9} parent=0 // pred_fallthru
    _
  // Predicated region
  $region10: #{transformer_forward.9} parent=0 // pred_check
    _
  $region11: #{transformer_forward.9} parent=0 // pred_check_branch
    %15 = sbr.rel (0) target = $region13
  $region12: #{transformer_forward.9} parent=0 // pred_region
    _
  $region13: #{transformer_forward.9} parent=0 // pred_fallthru
    _
  // Predicated region
  $region14: #{transformer_forward.9} parent=0 // pred_check
    _
  $region15: #{transformer_forward.9} parent=0 // pred_check_branch
    %17 = sbr.rel (0) target = $region17
  $region16: #{transformer_forward.9} parent=0 // pred_region
    _
  $region17: #{transformer_forward.9} parent=0 // pred_fallthru
    _
  // Predicated region
  $region18: #{transformer_forward.9} parent=0 // pred_check
    _
  $region19: #{transformer_forward.9} parent=0 // pred_check_branch
    %19 = sbr.rel (0) target = $region21
  $region20: #{transformer_forward.9} parent=0 // pred_region
    _
  $region21: #{transformer_forward.9} parent=0 // pred_fallthru
    _
  %v21 = vld [vmem:[%s0] sm:$0xff]
  %v22 = vld [vmem:[%s0 + $0x8] sm:$0xff]
  %v23 = vld [vmem:[%s0 + $0x10] sm:$0xff]
  %v24 = vld [vmem:[%s0 + $0x18] sm:$0xff]
  %v25 = vld [vmem:[%s1] sm:$0x1]
  %v26 = vld [vmem:[%s2] sm:$0x1]
  %vm27 = vcmask 261120
  %v28 = vsel %vm27, %v21, 0.0
  %29 = vadd.xlane.f32.xlu0 %v28
  %v30 = vpop.xlane.xlu0 %29
  %v31 = vsel %vm27, %v22, 0.0
  %32 = vadd.xlane.f32.xlu0 %v31
  %v33 = vpop.xlane.xlu0 %32
  %v34 = vsel %vm27, %v23, 0.0
  %35 = vadd.xlane.f32.xlu0 %v34
  %v36 = vpop.xlane.xlu0 %35
  %v37 = vsel %vm27, %v24, 0.0
  %38 = vadd.xlane.f32.xlu0 %v37
  %v39 = vpop.xlane.xlu0 %38
  %v40 = vrcp.pop 32.0
  %v41 = vmul.f32 %v30, %v40
  %v42 = vmul.f32 %v33, %v40
  %v43 = vmul.f32 %v36, %v40
  %v44 = vmul.f32 %v39, %v40
  %v45 = vsub.f32 %v21, %v41
  %v46 = vsub.f32 %v22, %v42
  %v47 = vsub.f32 %v23, %v43
  %v48 = vsub.f32 %v24, %v44
  %v49 = vmul.f32 %v45, %v45
  %v50 = vmul.f32 %v46, %v46
  %v51 = vmul.f32 %v47, %v47
  %v52 = vmul.f32 %v48, %v48
  %v53 = vsel %vm27, %v49, 0.0
  %54 = vadd.xlane.f32.xlu0 %v53
  %v55 = vpop.xlane.xlu0 %54
  %v56 = vsel %vm27, %v50, 0.0
  %57 = vadd.xlane.f32.xlu0 %v56
  %v58 = vpop.xlane.xlu0 %57
  %v59 = vsel %vm27, %v51, 0.0
  %60 = vadd.xlane.f32.xlu0 %v59
  %v61 = vpop.xlane.xlu0 %60
  %v62 = vsel %vm27, %v52, 0.0
  %63 = vadd.xlane.f32.xlu0 %v62
  %v64 = vpop.xlane.xlu0 %63
  %v65 = vmul.f32 %v55, %v40
  %v66 = vmul.f32 %v58, %v40
  %v67 = vmul.f32 %v61, %v40
  %v68 = vmul.f32 %v64, %v40
  %v69 = vadd.f32 %v65, 1e-05
  %v70 = vadd.f32 %v66, 1e-05
  %v71 = vadd.f32 %v67, 1e-05
  %v72 = vadd.f32 %v68, 1e-05
  %v73 = vrsqrt.pop %v69
  %v74 = vrsqrt.pop %v70
  %v75 = vrsqrt.pop %v71
  %v76 = vrsqrt.pop %v72
  %v77 = vmul.f32 %v45, %v73
  %v78 = vmul.f32 %v46, %v74
  %v79 = vmul.f32 %v47, %v75
  %v80 = vmul.f32 %v48, %v76
  %v82 = vlaneseq
  %v83 = vshrl.u32 %v82, 7
  %v84 = vsub.s32 0, %v83
  %v85 = vrot.slane %v25, %v84
  %v87 = vmul.f32 %v77, %v85
  %v88 = vmul.f32 %v78, %v85
  %v89 = vmul.f32 %v79, %v85
  %v90 = vmul.f32 %v80, %v85
  %v92 = vlaneseq
  %v93 = vshrl.u32 %v92, 7
  %v94 = vsub.s32 0, %v93
  %v95 = vrot.slane %v26, %v94
  %v97 = vadd.f32 %v87, %v95
  %v98 = vadd.f32 %v88, %v95
  %v99 = vadd.f32 %v89, %v95
  %v100 = vadd.f32 %v90, %v95
  %v101 = vpack.c.bf16 %v98, %v97
  %v102 = vpack.c.bf16 %v100, %v99
  %v103 = vld [vmem:[%s3] sm:$0xf]
  %v104 = vld [vmem:[%s3 + $0x4] sm:$0xf]
  %v105 = vld [vmem:[%s3 + $0x8] sm:$0xf]
  %v106 = vld [vmem:[%s3 + $0xc] sm:$0xf]
  %v107 = vld [vmem:[%s4] sm:$0x1]
  %v109 = vlaneseq
  %v110 = vshrl.u32 %v109, 7
  %v111 = vsub.s32 0, %v110
  %v112 = vrot.slane %v107, %v111
  %v118 = vunpack.c.l.b16 %v103
  %v119 = vunpack.c.l.b16 %v104
  %v120 = vunpack.c.l.b16 %v105
  %v121 = vunpack.c.l.b16 %v106
  %v122 = vpack.c.b16 %v119, %v118
  %v123 = vpack.c.b16 %v121, %v120
  %v127 = vsel %vm27, %v101, 0
  %v130 = vsel %vm27, %v102, 0
  %132 = vmatprep.subr.bf16.mxu0 0
  %133 = vmatpush1.bf16.msra.mxu0 %v122
  %134 = vmatprep.subr.bf16.mxu0 0
  %135 = vmatpush1.bf16.msra.mxu0 %v123
  %136 = vmatprep.subr.bf16.mxu0 0
  %137 = vmatpush1.bf16.msra.mxu0 0
  %138 = vmatprep.subr.bf16.mxu0 0
  %139 = vmatpush1.bf16.msra.mxu0 0
  %140 = vmatprep.subr.bf16.mxu0 0
  %141 = vmatpush1.bf16.msra.mxu0 0
  %142 = vmatprep.subr.bf16.mxu0 0
  %143 = vmatpush1.bf16.msra.mxu0 0
  %144 = vmatprep.subr.bf16.mxu0 0
  %145 = vmatpush1.bf16.msra.mxu0 0
  %146 = vmatprep.subr.bf16.mxu0 0
  %147 = vmatpush1.bf16.msra.mxu0 0
  %148 = vmatprep.subr.bf16.mxu0 0
  %149 = vmatpush1.bf16.msra.mxu0 0
  %150 = vmatprep.subr.bf16.mxu0 0
  %151 = vmatpush1.bf16.msra.mxu0 0
  %152 = vmatprep.subr.bf16.mxu0 0
  %153 = vmatpush1.bf16.msra.mxu0 0
  %154 = vmatprep.subr.bf16.mxu0 0
  %155 = vmatpush1.bf16.msra.mxu0 0
  %156 = vmatprep.subr.bf16.mxu0 0
  %157 = vmatpush1.bf16.msra.mxu0 0
  %158 = vmatprep.subr.bf16.mxu0 0
  %159 = vmatpush1.bf16.msra.mxu0 0
  %160 = vmatprep.subr.bf16.mxu0 0
  %161 = vmatpush1.bf16.msra.mxu0 0
  %162 = vmatprep.subr.bf16.mxu0 0
  %163 = vmatpush1.bf16.msra.mxu0 0
  %164 = vmatprep.mubr.bf16.mxu0 0
  %165 = vmatmul.mubr.bf16.gmra.mrb[0].mxu0 %v127
  %v166 = vpop.f32.mrb[0].mxu0
  %v167 = vadd.f32 %v112, %v166
  %v168 = vpop.f32.mrb[0].mxu0
  %v169 = vpop.f32.mrb[0].mxu0
  %v170 = vadd.f32 %v112, %v169
  %v171 = vpop.f32.mrb[0].mxu0
  %172 = vmatprep.mubr.bf16.mxu0 0
  %173 = vmatmul.mubr.bf16.gmra.mrb[0].mxu0 %v130
  %v174 = vpop.f32.mrb[0].mxu0
  %v175 = vadd.f32 %v112, %v174
  %v176 = vpop.f32.mrb[0].mxu0
  %v177 = vpop.f32.mrb[0].mxu0
  %v178 = vadd.f32 %v112, %v177
  %v179 = vpop.f32.mrb[0].mxu0
  %180 = vdwg.mxu0
  %vm181 = vcmask 785408
  %182 = vst.msk [vmem:[%s5] sm:$0xff] %vm181, %v167
  %183 = vst.msk [vmem:[%s5 + $0x8] sm:$0xff] %vm181, %v170
  %184 = vst.msk [vmem:[%s5 + $0x10] sm:$0xff] %vm181, %v175
  %185 = vst.msk [vmem:[%s5 + $0x18] sm:$0xff] %vm181, %v178
  // Predicated region
  $region22: #{transformer_forward.9} parent=0 // pred_check
    _
  $region23: #{transformer_forward.9} parent=0 // pred_check_branch
    %187 = sbr.rel (0) target = $region25
  $region24: #{transformer_forward.9} parent=0 // pred_region
    _
  $region25: #{transformer_forward.9} parent=0 // pred_fallthru
    _
  // Predicated region
  $region26: #{transformer_forward.9} parent=0 // pred_check
    _
  $region27: #{transformer_forward.9} parent=0 // pred_check_branch
    %189 = sbr.rel (0) target = $region29
  $region28: #{transformer_forward.9} parent=0 // pred_region
    _
  $region29: #{transformer_forward.9} parent=0 // pred_fallthru
    _

// kernel: transformer_forward.8
$region0: #{transformer_forward.8}
  #allocation0 [shape = 'u32[]', space=smem, size = 0x4, offset = 0x4, fixed_abs, tag = 'smem constant byte address 0x4 - core index']
  #allocation1 [shape = 'u32[144,128]{1,0:T(1,128)}', space=vmem, size = 0x12000, scoped, tag = 'internal scratch']
  %s0 = inlined_call_operand.vmem [shape: f32[2,16,8], index: 0, kind: input, shape index: {}]
  %s1 = inlined_call_operand.vmem [shape: bf16[8,32], index: 1, kind: input, shape index: {}]
  %s2 = inlined_call_operand.vmem [shape: f32[1,32], index: 2, kind: input, shape index: {}]
  %s3 = inlined_call_operand.vmem [shape: f32[16,32], index: 3, kind: input, shape index: {}]
  %s4 = inlined_call_operand.vmem [shape: f32[2,16,32], index: 4, kind: output, shape index: {}]
  %s5 = sld [smem:[#allocation0]]
  $region49: #{transformer_forward.8} parent=0
    _
  %s7 = ssub.s32 1, %s5
  %s8 = scalar_select 0, %s7, %s5
  loop: start=0, step=1, limit=4
  $region2: #{transformer_forward.8} parent=0 // loop_pre_header
    _
  $region3: #{transformer_forward.8} parent=0 // loop_header
    %s10 = sphi 0, %s14
    %p11 = scmp.ge.s32.totalorder %s10, 4
    %s17 = sphi 0, %s29
    %s18 = sphi 0, %s25
    %s19 = sphi 0, %s17
    %s20 = sphi 0, %s18
    %s21 = sphi 0, %s19
    %s22 = sphi 0, %s20
    %s34 = sphi 0, %s36
    %s37 = sphi 0, %s34
    %s38 = sphi 0, %s37
    %s54 = sphi 0, %s38
    %s58 = sphi 0, %s58
    %s60 = sphi 0, %s58
    %s61 = sphi 0, %s60
    %s75 = sphi 0, %s61
    %s79 = sphi 0, %s79
    %s81 = sphi 0, %s79
    %s82 = sphi 0, %s81
    %s96 = sphi 0, %s82
    %s102 = sphi 0, %s104
    %s105 = sphi 0, %s102
    %s106 = sphi 0, %s105
    %s122 = sphi 0, %s106
    %s130 = sphi 0, %s132
    %s133 = sphi 0, %s130
    %s134 = sphi 0, %s133
    %s150 = sphi 0, %s134
  $region4: #{transformer_forward.8} parent=0 // loop_header_branch
    %13 = sbr.rel (%p11) target = $region8
  $region5: #{transformer_forward.8} parent=0 // loop_body
    %s15 = ssub.s32 %s10, 1
    %s16 = ssub.s32 %s10, 2
    %s23 = sadd.s32 1, %s18
    %p24 = scmp.ge.s32.totalorder %s23, 1
    %s25 = scalar_select %p24, 0, %s23
    %s26 = sadd.s32 1, %s17
    %s27 = scalar_select %p24, %s26, %s17
    %p28 = scmp.ge.s32.totalorder %s27, 2
    %s29 = scalar_select %p28, 0, %s27
    %s30 = ssub.s32 %s17, %s29
    %s31 = ssub.s32 %s18, %s25
    %s32 = sor.u32 %s30, %s31
    %p33 = scmp.eq.s32.totalorder %s32, 0
    %s35 = sadd.s32 %s34, 1
    %s36 = scalar_select %p33, %s34, %s35
    %p39 = pneg %p33
    %p40 = scmp.eq.s32.totalorder %s10, 1
    %p41 = por %p39, %p40
    %p42 = scmp.ne.s32.totalorder %s34, %s37
    %p43 = scmp.eq.s32.totalorder %s10, 0
    %p44 = por %p42, %p43
    %p45 = scmp.ne.s32.totalorder %s34, %s37
    %p46 = scmp.eq.s32.totalorder %s15, 1
    %p47 = por %p45, %p46
    %p48 = scmp.ne.s32.totalorder %s37, %s38
    %p49 = scmp.eq.s32.totalorder %s15, 0
    %p50 = por %p48, %p49
    %p51 = scmp.ne.s32.totalorder %s37, %s38
    %p52 = scmp.eq.s32.totalorder %s16, 1
    %p53 = por %p51, %p52
    %p55 = scmp.ne.s32.totalorder %s38, %s54
    %p56 = scmp.eq.s32.totalorder %s16, 0
    %p57 = por %p55, %p56
    %s59 = sadd.s32 %s58, 1
    %p62 = scmp.eq.s32.totalorder %s10, 1
    %p63 = scmp.ne.s32.totalorder %s58, %s60
    %p64 = scmp.eq.s32.totalorder %s10, 0
    %p65 = por %p63, %p64
    %p66 = scmp.ne.s32.totalorder %s58, %s60
    %p67 = scmp.eq.s32.totalorder %s15, 1
    %p68 = por %p66, %p67
    %p69 = scmp.ne.s32.totalorder %s60, %s61
    %p70 = scmp.eq.s32.totalorder %s15, 0
    %p71 = por %p69, %p70
    %p72 = scmp.ne.s32.totalorder %s60, %s61
    %p73 = scmp.eq.s32.totalorder %s16, 1
    %p74 = por %p72, %p73
    %p76 = scmp.ne.s32.totalorder %s61, %s75
    %p77 = scmp.eq.s32.totalorder %s16, 0
    %p78 = por %p76, %p77
    %s80 = sadd.s32 %s79, 1
    %p83 = scmp.eq.s32.totalorder %s10, 1
    %p84 = scmp.ne.s32.totalorder %s79, %s81
    %p85 = scmp.eq.s32.totalorder %s10, 0
    %p86 = por %p84, %p85
    %p87 = scmp.ne.s32.totalorder %s79, %s81
    %p88 = scmp.eq.s32.totalorder %s15, 1
    %p89 = por %p87, %p88
    %p90 = scmp.ne.s32.totalorder %s81, %s82
    %p91 = scmp.eq.s32.totalorder %s15, 0
    %p92 = por %p90, %p91
    %p93 = scmp.ne.s32.totalorder %s81, %s82
    %p94 = scmp.eq.s32.totalorder %s16, 1
    %p95 = por %p93, %p94
    %p97 = scmp.ne.s32.totalorder %s82, %s96
    %p98 = scmp.eq.s32.totalorder %s16, 0
    %p99 = por %p97, %p98
    %s100 = ssub.s32 %s18, %s25
    %p101 = scmp.eq.s32.totalorder %s100, 0
    %s103 = sadd.s32 %s102, 1
    %s104 = scalar_select %p101, %s102, %s103
    %p107 = pneg %p101
    %p108 = scmp.eq.s32.totalorder %s10, 1
    %p109 = por %p107, %p108
    %p110 = scmp.ne.s32.totalorder %s102, %s105
    %p111 = scmp.eq.s32.totalorder %s10, 0
    %p112 = por %p110, %p111
    %p113 = scmp.ne.s32.totalorder %s102, %s105
    %p114 = scmp.eq.s32.totalorder %s15, 1
    %p115 = por %p113, %p114
    %p116 = scmp.ne.s32.totalorder %s105, %s106
    %p117 = scmp.eq.s32.totalorder %s15, 0
    %p118 = por %p116, %p117
    %p119 = scmp.ne.s32.totalorder %s105, %s106
    %p120 = scmp.eq.s32.totalorder %s16, 1
    %p121 = por %p119, %p120
    %p123 = scmp.ne.s32.totalorder %s106, %s122
    %p124 = scmp.eq.s32.totalorder %s16, 0
    %p125 = por %p123, %p124
    %s126 = ssub.s32 %s17, %s29
    %s127 = ssub.s32 %s18, %s25
    %s128 = sor.u32 %s126, %s127
    %p129 = scmp.eq.s32.totalorder %s128, 0
    %s131 = sadd.s32 %s130, 1
    %s132 = scalar_select %p129, %s130, %s131
    %p135 = pneg %p129
    %p136 = scmp.eq.s32.totalorder %s10, 1
    %p137 = por %p135, %p136
    %p138 = scmp.ne.s32.totalorder %s130, %s133
    %p139 = scmp.eq.s32.totalorder %s10, 0
    %p140 = por %p138, %p139
    %p141 = scmp.ne.s32.totalorder %s130, %s133
    %p142 = scmp.eq.s32.totalorder %s15, 1
    %p143 = por %p141, %p142
    %p144 = scmp.ne.s32.totalorder %s133, %s134
    %p145 = scmp.eq.s32.totalorder %s15, 0
    %p146 = por %p144, %p145
    %p147 = scmp.ne.s32.totalorder %s133, %s134
    %p148 = scmp.eq.s32.totalorder %s16, 1
    %p149 = por %p147, %p148
    %p151 = scmp.ne.s32.totalorder %s134, %s150
    %p152 = scmp.eq.s32.totalorder %s16, 0
    %p153 = por %p151, %p152
    %p154 = scmp.le.s32.totalorder 1, %s10
    %p155 = scmp.lt.s32.totalorder %s10, 3
    %p156 = pnand %p154, %p155
    %p157 = pneg %p156
    // Predicated region
    $region9: #{transformer_forward.8} parent=5 // pred_check
      _
    $region10: #{transformer_forward.8} parent=5 // pred_check_branch
      %159 = sbr.rel (%p156) target = $region12
    $region11: #{transformer_forward.8} parent=5 // pred_region
      %s160 = ssub.s32 %s10, 1
      // Predicated region
      $region13: #{transformer_forward.8} parent=11 // pred_check
        %p161 = pneg %p71
      $region14: #{transformer_forward.8} parent=11 // pred_check_branch
        %163 = sbr.rel (%p161) target = $region16
      $region15: #{transformer_forward.8} parent=11 // pred_region
        _
      $region16: #{transformer_forward.8} parent=11 // pred_fallthru
        _
      // Predicated region
      $region17: #{transformer_forward.8} parent=11 // pred_check
        %p164 = pneg %p92
      $region18: #{transformer_forward.8} parent=11 // pred_check_branch
        %166 = sbr.rel (%p164) target = $region20
      $region19: #{transformer_forward.8} parent=11 // pred_region
        _
      $region20: #{transformer_forward.8} parent=11 // pred_fallthru
        _
      // Predicated region
      $region21: #{transformer_forward.8} parent=11 // pred_check
        %p167 = pneg %p118
      $region22: #{transformer_forward.8} parent=11 // pred_check_branch
        %169 = sbr.rel (%p167) target = $region24
      $region23: #{transformer_forward.8} parent=11 // pred_region
        %s170 = smul.u32 2, %s20
        %p171 = scmp.lt.s32.totalorder %s170, 1
        %s172 = scalar_select %p171, %s170, 1
        %s173 = smul.addr %s172, 8
        %s174 = scalar_lea.vmem %s3, %s173
        %s175 = smul.u32 2, %s20
      $region24: #{transformer_forward.8} parent=11 // pred_fallthru
        _
    $region12: #{transformer_forward.8} parent=5 // pred_fallthru
      _
    %p176 = scmp.lt.s32.totalorder %s10, 2
    // Predicated region
    $region25: #{transformer_forward.8} parent=5 // pred_check
      %p177 = pneg %p176
    $region26: #{transformer_forward.8} parent=5 // pred_check_branch
      %179 = sbr.rel (%p177) target = $region28
    $region27: #{transformer_forward.8} parent=5 // pred_region
      // Predicated region
      $region29: #{transformer_forward.8} parent=27 // pred_check
        %p180 = pneg %p44
      $region30: #{transformer_forward.8} parent=27 // pred_check_branch
        %182 = sbr.rel (%p180) target = $region32
      $region31: #{transformer_forward.8} parent=27 // pred_region
        %s183 = smul.u32 2, %s18
        %p184 = scmp.lt.s32.totalorder %s17, 1
        %s185 = scalar_select %p184, %s17, 1
        %p186 = scmp.lt.s32.totalorder %s183, 1
        %s187 = scalar_select %p186, %s183, 1
        %s188 = smul.addr %s185, 2
        %s189 = sadd.s32 %s187, %s188
        %s190 = smul.addr %s189, 8
        %s191 = scalar_lea.vmem %s0, %s190
        %s192 = smul.u32 2, %s18
      $region32: #{transformer_forward.8} parent=27 // pred_fallthru
        _
    $region28: #{transformer_forward.8} parent=5 // pred_fallthru
      _
    %p193 = scmp.le.s32.totalorder 1, %s10
    %p194 = scmp.lt.s32.totalorder %s10, 3
    %p195 = pnand %p193, %p194
    %p196 = pneg %p195
    // Predicated region
    $region33: #{transformer_forward.8} parent=5 // pred_check
      _
    $region34: #{transformer_forward.8} parent=5 // pred_check_branch
      %198 = sbr.rel (%p195) target = $region36
    $region35: #{transformer_forward.8} parent=5 // pred_region
      %s199 = ssub.s32 %s10, 1
      %s200 = smul.u32 2, %s20
      %p201 = scmp.lt.s32.totalorder %s19, 1
      %s202 = scalar_select %p201, %s19, 1
      %p203 = scmp.lt.s32.totalorder %s200, 1
      %s204 = scalar_select %p203, %s200, 1
      %s205 = smul.addr %s202, 2
      %s206 = sadd.s32 %s204, %s205
      %s207 = smul.addr %s206, 8
      %s208 = scalar_lea.vmem %s0, %s207
      %p209 = pneg %p50
      %p210 = pneg %p47
      %p211 = pneg %p71
      %p212 = pneg %p68
      %p213 = pneg %p92
      %p214 = pneg %p89
      %s215 = smul.u32 2, %s20
      %p216 = scmp.lt.s32.totalorder %s215, 1
      %s217 = scalar_select %p216, %s215, 1
      %s218 = smul.addr %s217, 8
      %s219 = scalar_lea.vmem %s3, %s218
      %p220 = pneg %p118
      %p221 = pneg %p115
      %p222 = pneg %p146
      %p223 = pneg %p143
      %s224 = smul.u32 2, %s20
      %p225 = scmp.lt.s32.totalorder %s19, 1
      %s226 = scalar_select %p225, %s19, 1
      %p227 = scmp.lt.s32.totalorder %s224, 1
      %s228 = scalar_select %p227, %s224, 1
      %s229 = smul.addr %s226, 2
      %s230 = sadd.s32 %s228, %s229
      %s231 = smul.addr %s230, 8
      %s232 = scalar_lea.vmem %s4, %s231
      %s233 = smul.u32 2, %s20
      %p234 = scmp.lt.s32.totalorder %s19, 1
      %s235 = scalar_select %p234, %s19, 1
      %p236 = scmp.lt.s32.totalorder %s233, 1
      %s237 = scalar_select %p236, %s233, 1
      %s238 = smul.addr %s235, 2
      %s239 = sadd.s32 %s237, %s238
      %s240 = smul.addr %s239, 8
      %s241 = scalar_lea.vmem %s0, %s240
      %s242 = smul.u32 2, %s20
      %s243 = smul.u32 2, %s20
      %p244 = scmp.lt.s32.totalorder %s243, 1
      %s245 = scalar_select %p244, %s243, 1
      %s246 = smul.addr %s245, 8
      %s247 = scalar_lea.vmem %s3, %s246
      %s248 = smul.u32 2, %s20
      %s249 = smul.u32 2, %s20
      %p250 = scmp.lt.s32.totalorder %s19, 1
      %s251 = scalar_select %p250, %s19, 1
      %p252 = scmp.lt.s32.totalorder %s249, 1
      %s253 = scalar_select %p252, %s249, 1
      %s254 = smul.addr %s251, 2
      %s255 = sadd.s32 %s253, %s254
      %s256 = smul.addr %s255, 8
      %s257 = scalar_lea.vmem %s4, %s256
      %s258 = smul.u32 2, %s20
      %v260 = vld [vmem:[%s241] sm:$0xff]
      %v261 = vld [vmem:[%s241 + $0x8] sm:$0xff]
      %v262 = vpack.c.bf16 %v261, %v260
      %v263 = vld [vmem:[%s1] sm:$0xf]
      %v264 = vld [vmem:[%s2] sm:$0x1]
      %v266 = vlaneseq
      %v267 = vshrl.u32 %v266, 7
      %v268 = vsub.s32 0, %v267
      %v269 = vrot.slane %v264, %v268
      %vm271 = vcmask 64512
      %v273 = vsel %vm271, %v262, 0
      %vm275 = vcmask 1043456
      %v277 = vsel %vm275, %v263, 0
      %279 = vmatprep.subr.bf16.mxu0 0
      %280 = vmatpush1.bf16.msra.mxu0 %v277
      %281 = vmatprep.subr.bf16.mxu0 0
      %282 = vmatpush1.bf16.msra.mxu0 0
      %283 = vmatprep.subr.bf16.mxu0 0
      %284 = vmatpush1.bf16.msra.mxu0 0
      %285 = vmatprep.subr.bf16.mxu0 0
      %286 = vmatpush1.bf16.msra.mxu0 0
      %287 = vmatprep.subr.bf16.mxu0 0
      %288 = vmatpush1.bf16.msra.mxu0 0
      %289 = vmatprep.subr.bf16.mxu0 0
      %290 = vmatpush1.bf16.msra.mxu0 0
      %291 = vmatprep.subr.bf16.mxu0 0
      %292 = vmatpush1.bf16.msra.mxu0 0
      %293 = vmatprep.subr.bf16.mxu0 0
      %294 = vmatpush1.bf16.msra.mxu0 0
      %295 = vmatprep.subr.bf16.mxu0 0
      %296 = vmatpush1.bf16.msra.mxu0 0
      %297 = vmatprep.subr.bf16.mxu0 0
      %298 = vmatpush1.bf16.msra.mxu0 0
      %299 = vmatprep.subr.bf16.mxu0 0
      %300 = vmatpush1.bf16.msra.mxu0 0
      %301 = vmatprep.subr.bf16.mxu0 0
      %302 = vmatpush1.bf16.msra.mxu0 0
      %303 = vmatprep.subr.bf16.mxu0 0
      %304 = vmatpush1.bf16.msra.mxu0 0
      %305 = vmatprep.subr.bf16.mxu0 0
      %306 = vmatpush1.bf16.msra.mxu0 0
      %307 = vmatprep.subr.bf16.mxu0 0
      %308 = vmatpush1.bf16.msra.mxu0 0
      %309 = vmatprep.subr.bf16.mxu0 0
      %310 = vmatpush1.bf16.msra.mxu0 0
      %311 = vmatprep.mubr.bf16.mxu0 0
      %312 = vmatmul.mubr.bf16.gmra.mrb[0].mxu0 %v273
      %v313 = vpop.f32.mrb[0].mxu0
      %v314 = vadd.f32 %v269, %v313
      %v315 = vpop.f32.mrb[0].mxu0
      %v316 = vpop.f32.mrb[0].mxu0
      %v317 = vadd.f32 %v269, %v316
      %v318 = vpop.f32.mrb[0].mxu0
      %319 = vdwg.mxu0
      %v320 = vld [vmem:[%s247] sm:$0xff]
      %v321 = vld [vmem:[%s247 + $0x8] sm:$0xff]
      %v322 = vadd.f32 %v314, %v320
      %v323 = vadd.f32 %v317, %v321
      %vm324 = vcmask 261120
      %325 = vst.msk [vmem:[%s257] sm:$0xff] %vm324, %v322
      %326 = vst.msk [vmem:[%s257 + $0x8] sm:$0xff] %vm324, %v323
      %s327 = smul.u32 2, %s20
      %p328 = scmp.lt.s32.totalorder %s19, 1
      %s329 = scalar_select %p328, %s19, 1
      %p330 = scmp.lt.s32.totalorder %s327, 1
      %s331 = scalar_select %p330, %s327, 1
      %s332 = smul.addr %s329, 2
      %s333 = sadd.s32 %s331, %s332
      %s334 = smul.addr %s333, 8
      %s335 = scalar_lea.vmem %s4, %s334
      // Predicated region
      $region37: #{transformer_forward.8} parent=35 // pred_check
        %p336 = pneg %p143
      $region38: #{transformer_forward.8} parent=35 // pred_check_branch
        %338 = sbr.rel (%p336) target = $region40
      $region39: #{transformer_forward.8} parent=35 // pred_region
        %s339 = smul.u32 2, %s20
      $region40: #{transformer_forward.8} parent=35 // pred_fallthru
        _
    $region36: #{transformer_forward.8} parent=5 // pred_fallthru
      _
    %p340 = scmp.le.s32.totalorder 2, %s10
    // Predicated region
    $region41: #{transformer_forward.8} parent=5 // pred_check
      %p341 = pneg %p340
    $region42: #{transformer_forward.8} parent=5 // pred_check_branch
      %343 = sbr.rel (%p341) target = $region44
    $region43: #{transformer_forward.8} parent=5 // pred_region
      %s344 = ssub.s32 %s10, 2
      // Predicated region
      $region45: #{transformer_forward.8} parent=43 // pred_check
        %p345 = pneg %p149
      $region46: #{transformer_forward.8} parent=43 // pred_check_branch
        %347 = sbr.rel (%p345) target = $region48
      $region47: #{transformer_forward.8} parent=43 // pred_region
        %s348 = smul.u32 2, %s22
        %p349 = scmp.lt.s32.totalorder %s21, 1
        %s350 = scalar_select %p349, %s21, 1
        %p351 = scmp.lt.s32.totalorder %s348, 1
        %s352 = scalar_select %p351, %s348, 1
        %s353 = smul.addr %s350, 2
        %s354 = sadd.s32 %s352, %s353
        %s355 = smul.addr %s354, 8
        %s356 = scalar_lea.vmem %s4, %s355
      $region48: #{transformer_forward.8} parent=43 // pred_fallthru
        _
    $region44: #{transformer_forward.8} parent=5 // pred_fallthru
      _
  $region6: #{transformer_forward.8} parent=0 // loop_footer
    %s14 = sadd.s32 1, %s10
  $region7: #{transformer_forward.8} parent=0 // loop_footer_branch
    %9 = sbr.rel target = $region3
  $region8: #{transformer_forward.8} parent=0 // loop_exit
    _

// kernel: transformer_forward.11
$region0: #{transformer_forward.11}
  #allocation0 [shape = 'u32[]', space=smem, size = 0x4, offset = 0x4, fixed_abs, tag = 'smem constant byte address 0x4 - core index']
  #allocation1 [shape = 'u32[144,128]{1,0:T(1,128)}', space=vmem, size = 0x12000, scoped, tag = 'internal scratch']
  %s0 = inlined_call_operand.vmem [shape: f32[32,32], index: 0, kind: input, shape index: {}]
  %s1 = inlined_call_operand.vmem [shape: f32[1,32], index: 1, kind: input, shape index: {}]
  %s2 = inlined_call_operand.vmem [shape: f32[1,32], index: 2, kind: input, shape index: {}]
  %s3 = inlined_call_operand.vmem [shape: bf16[32,128], index: 3, kind: input, shape index: {}]
  %s4 = inlined_call_operand.vmem [shape: f32[1,128], index: 4, kind: input, shape index: {}]
  %s5 = inlined_call_operand.vmem [shape: bf16[128,32], index: 5, kind: input, shape index: {}]
  %s6 = inlined_call_operand.vmem [shape: f32[1,32], index: 6, kind: input, shape index: {}]
  %s7 = inlined_call_operand.vmem [shape: f32[32,32], index: 7, kind: output, shape index: {}]
  %s8 = sld [smem:[#allocation0]]
  $region38: #{transformer_forward.11} parent=0
    _
  %s10 = ssub.s32 1, %s8
  %s11 = scalar_select 0, %s10, %s8
  // Predicated region
  $region2: #{transformer_forward.11} parent=0 // pred_check
    _
  $region3: #{transformer_forward.11} parent=0 // pred_check_branch
    %13 = sbr.rel (0) target = $region5
  $region4: #{transformer_forward.11} parent=0 // pred_region
    _
  $region5: #{transformer_forward.11} parent=0 // pred_fallthru
    _
  // Predicated region
  $region6: #{transformer_forward.11} parent=0 // pred_check
    _
  $region7: #{transformer_forward.11} parent=0 // pred_check_branch
    %15 = sbr.rel (0) target = $region9
  $region8: #{transformer_forward.11} parent=0 // pred_region
    _
  $region9: #{transformer_forward.11} parent=0 // pred_fallthru
    _
  // Predicated region
  $region10: #{transformer_forward.11} parent=0 // pred_check
    _
  $region11: #{transformer_forward.11} parent=0 // pred_check_branch
    %17 = sbr.rel (0) target = $region13
  $region12: #{transformer_forward.11} parent=0 // pred_region
    _
  $region13: #{transformer_forward.11} parent=0 // pred_fallthru
    _
  // Predicated region
  $region14: #{transformer_forward.11} parent=0 // pred_check
    _
  $region15: #{transformer_forward.11} parent=0 // pred_check_branch
    %19 = sbr.rel (0) target = $region17
  $region16: #{transformer_forward.11} parent=0 // pred_region
    _
  $region17: #{transformer_forward.11} parent=0 // pred_fallthru
    _
  // Predicated region
  $region18: #{transformer_forward.11} parent=0 // pred_check
    _
  $region19: #{transformer_forward.11} parent=0 // pred_check_branch
    %21 = sbr.rel (0) target = $region21
  $region20: #{transformer_forward.11} parent=0 // pred_region
    _
  $region21: #{transformer_forward.11} parent=0 // pred_fallthru
    _
  // Predicated region
  $region22: #{transformer_forward.11} parent=0 // pred_check
    _
  $region23: #{transformer_forward.11} parent=0 // pred_check_branch
    %23 = sbr.rel (0) target = $region25
  $region24: #{transformer_forward.11} parent=0 // pred_region
    _
  $region25: #{transformer_forward.11} parent=0 // pred_fallthru
    _
  // Predicated region
  $region26: #{transformer_forward.11} parent=0 // pred_check
    _
  $region27: #{transformer_forward.11} parent=0 // pred_check_branch
    %25 = sbr.rel (0) target = $region29
  $region28: #{transformer_forward.11} parent=0 // pred_region
    _
  $region29: #{transformer_forward.11} parent=0 // pred_fallthru
    _
  %v27 = vld [vmem:[%s0] sm:$0xff]
  %v28 = vld [vmem:[%s0 + $0x8] sm:$0xff]
  %v29 = vld [vmem:[%s0 + $0x10] sm:$0xff]
  %v30 = vld [vmem:[%s0 + $0x18] sm:$0xff]
  %v31 = vld [vmem:[%s1] sm:$0x1]
  %v32 = vld [vmem:[%s2] sm:$0x1]
  %vm33 = vcmask 261120
  %v34 = vsel %vm33, %v27, 0.0
  %35 = vadd.xlane.f32.xlu0 %v34
  %v36 = vpop.xlane.xlu0 %35
  %v37 = vsel %vm33, %v28, 0.0
  %38 = vadd.xlane.f32.xlu0 %v37
  %v39 = vpop.xlane.xlu0 %38
  %v40 = vsel %vm33, %v29, 0.0
  %41 = vadd.xlane.f32.xlu0 %v40
  %v42 = vpop.xlane.xlu0 %41
  %v43 = vsel %vm33, %v30, 0.0
  %44 = vadd.xlane.f32.xlu0 %v43
  %v45 = vpop.xlane.xlu0 %44
  %v46 = vrcp.pop 32.0
  %v47 = vmul.f32 %v36, %v46
  %v48 = vmul.f32 %v39, %v46
  %v49 = vmul.f32 %v42, %v46
  %v50 = vmul.f32 %v45, %v46
  %v51 = vsub.f32 %v27, %v47
  %v52 = vsub.f32 %v28, %v48
  %v53 = vsub.f32 %v29, %v49
  %v54 = vsub.f32 %v30, %v50
  %v55 = vmul.f32 %v51, %v51
  %v56 = vmul.f32 %v52, %v52
  %v57 = vmul.f32 %v53, %v53
  %v58 = vmul.f32 %v54, %v54
  %v59 = vsel %vm33, %v55, 0.0
  %60 = vadd.xlane.f32.xlu0 %v59
  %v61 = vpop.xlane.xlu0 %60
  %v62 = vsel %vm33, %v56, 0.0
  %63 = vadd.xlane.f32.xlu0 %v62
  %v64 = vpop.xlane.xlu0 %63
  %v65 = vsel %vm33, %v57, 0.0
  %66 = vadd.xlane.f32.xlu0 %v65
  %v67 = vpop.xlane.xlu0 %66
  %v68 = vsel %vm33, %v58, 0.0
  %69 = vadd.xlane.f32.xlu0 %v68
  %v70 = vpop.xlane.xlu0 %69
  %v71 = vmul.f32 %v61, %v46
  %v72 = vmul.f32 %v64, %v46
  %v73 = vmul.f32 %v67, %v46
  %v74 = vmul.f32 %v70, %v46
  %v75 = vadd.f32 %v71, 1e-05
  %v76 = vadd.f32 %v72, 1e-05
  %v77 = vadd.f32 %v73, 1e-05
  %v78 = vadd.f32 %v74, 1e-05
  %v79 = vrsqrt.pop %v75
  %v80 = vrsqrt.pop %v76
  %v81 = vrsqrt.pop %v77
  %v82 = vrsqrt.pop %v78
  %v83 = vmul.f32 %v51, %v79
  %v84 = vmul.f32 %v52, %v80
  %v85 = vmul.f32 %v53, %v81
  %v86 = vmul.f32 %v54, %v82
  %v88 = vlaneseq
  %v89 = vshrl.u32 %v88, 7
  %v90 = vsub.s32 0, %v89
  %v91 = vrot.slane %v31, %v90
  %v93 = vmul.f32 %v83, %v91
  %v94 = vmul.f32 %v84, %v91
  %v95 = vmul.f32 %v85, %v91
  %v96 = vmul.f32 %v86, %v91
  %v98 = vlaneseq
  %v99 = vshrl.u32 %v98, 7
  %v100 = vsub.s32 0, %v99
  %v101 = vrot.slane %v32, %v100
  %v103 = vadd.f32 %v93, %v101
  %v104 = vadd.f32 %v94, %v101
  %v105 = vadd.f32 %v95, %v101
  %v106 = vadd.f32 %v96, %v101
  %v107 = vpack.c.bf16 %v104, %v103
  %v108 = vpack.c.bf16 %v106, %v105
  %v109 = vld [vmem:[%s3] sm:$0xf]
  %v110 = vld [vmem:[%s3 + $0x4] sm:$0xf]
  %v111 = vld [vmem:[%s3 + $0x8] sm:$0xf]
  %v112 = vld [vmem:[%s3 + $0xc] sm:$0xf]
  %v113 = vld [vmem:[%s4] sm:$0x1]
  %v115 = vlaneseq
  %v116 = vshrl.u32 %v115, 7
  %v117 = vsub.s32 0, %v116
  %v118 = vrot.slane %v113, %v117
  %v124 = vunpack.c.l.b16 %v109
  %v125 = vunpack.c.l.b16 %v110
  %v126 = vunpack.c.l.b16 %v111
  %v127 = vunpack.c.l.b16 %v112
  %v128 = vpack.c.b16 %v125, %v124
  %v129 = vpack.c.b16 %v127, %v126
  %v133 = vsel %vm33, %v107, 0
  %v136 = vsel %vm33, %v108, 0
  %138 = vmatprep.subr.bf16.mxu0 0
  %139 = vmatpush1.bf16.msra.mxu0 %v128
  %140 = vmatprep.subr.bf16.mxu0 0
  %141 = vmatpush1.bf16.msra.mxu0 %v129
  %142 = vmatprep.subr.bf16.mxu0 0
  %143 = vmatpush1.bf16.msra.mxu0 0
  %144 = vmatprep.subr.bf16.mxu0 0
  %145 = vmatpush1.bf16.msra.mxu0 0
  %146 = vmatprep.subr.bf16.mxu0 0
  %147 = vmatpush1.bf16.msra.mxu0 0
  %148 = vmatprep.subr.bf16.mxu0 0
  %149 = vmatpush1.bf16.msra.mxu0 0
  %150 = vmatprep.subr.bf16.mxu0 0
  %151 = vmatpush1.bf16.msra.mxu0 0
  %152 = vmatprep.subr.bf16.mxu0 0
  %153 = vmatpush1.bf16.msra.mxu0 0
  %154 = vmatprep.subr.bf16.mxu0 0
  %155 = vmatpush1.bf16.msra.mxu0 0
  %156 = vmatprep.subr.bf16.mxu0 0
  %157 = vmatpush1.bf16.msra.mxu0 0
  %158 = vmatprep.subr.bf16.mxu0 0
  %159 = vmatpush1.bf16.msra.mxu0 0
  %160 = vmatprep.subr.bf16.mxu0 0
  %161 = vmatpush1.bf16.msra.mxu0 0
  %162 = vmatprep.subr.bf16.mxu0 0
  %163 = vmatpush1.bf16.msra.mxu0 0
  %164 = vmatprep.subr.bf16.mxu0 0
  %165 = vmatpush1.bf16.msra.mxu0 0
  %166 = vmatprep.subr.bf16.mxu0 0
  %167 = vmatpush1.bf16.msra.mxu0 0
  %168 = vmatprep.subr.bf16.mxu0 0
  %169 = vmatpush1.bf16.msra.mxu0 0
  %170 = vmatprep.mubr.bf16.mxu0 0
  %171 = vmatmul.mubr.bf16.gmra.mrb[0].mxu0 %v133
  %v172 = vpop.f32.mrb[0].mxu0
  %v173 = vadd.f32 %v118, %v172
  %v174 = vpop.f32.mrb[0].mxu0
  %v175 = vpop.f32.mrb[0].mxu0
  %v176 = vadd.f32 %v118, %v175
  %v177 = vpop.f32.mrb[0].mxu0
  %178 = vmatprep.mubr.bf16.mxu0 0
  %179 = vmatmul.mubr.bf16.gmra.mrb[0].mxu0 %v136
  %v180 = vpop.f32.mrb[0].mxu0
  %v181 = vadd.f32 %v118, %v180
  %v182 = vpop.f32.mrb[0].mxu0
  %v183 = vpop.f32.mrb[0].mxu0
  %v184 = vadd.f32 %v118, %v183
  %v185 = vpop.f32.mrb[0].mxu0
  %186 = vdwg.mxu0
  %v187 = vmul.f32 %v173, 0.5
  %v188 = vmul.f32 %v176, 0.5
  %v189 = vmul.f32 %v181, 0.5
  %v190 = vmul.f32 %v184, 0.5
  %v191 = vmul.f32 %v173, 0.044715
  %v192 = vmul.f32 %v176, 0.044715
  %v193 = vmul.f32 %v181, 0.044715
  %v194 = vmul.f32 %v184, 0.044715
  %v195 = vmul.f32 %v191, %v173
  %v196 = vmul.f32 %v192, %v176
  %v197 = vmul.f32 %v193, %v181
  %v198 = vmul.f32 %v194, %v184
  %v199 = vmul.f32 %v195, %v173
  %v200 = vmul.f32 %v196, %v176
  %v201 = vmul.f32 %v197, %v181
  %v202 = vmul.f32 %v198, %v184
  %v203 = vadd.f32 %v173, %v199
  %v204 = vadd.f32 %v176, %v200
  %v205 = vadd.f32 %v181, %v201
  %v206 = vadd.f32 %v184, %v202
  %v207 = vmul.f32 %v203, 0.7978846
  %v208 = vmul.f32 %v204, 0.7978846
  %v209 = vmul.f32 %v205, 0.7978846
  %v210 = vmul.f32 %v206, 0.7978846
  %v211 = vtanh.pop %v207
  %v212 = vtanh.pop %v208
  %v213 = vtanh.pop %v209
  %v214 = vtanh.pop %v210
  %v215 = vadd.f32 %v211, 1.0
  %v216 = vadd.f32 %v212, 1.0
  %v217 = vadd.f32 %v213, 1.0
  %v218 = vadd.f32 %v214, 1.0
  %v219 = vmul.f32 %v187, %v215
  %v220 = vmul.f32 %v188, %v216
  %v221 = vmul.f32 %v189, %v217
  %v222 = vmul.f32 %v190, %v218
  %v223 = vpack.c.bf16 %v220, %v219
  %v224 = vpack.c.bf16 %v222, %v221
  %v225 = vld [vmem:[%s5] sm:$0xf]
  %v226 = vld [vmem:[%s5 + $0x4] sm:$0xf]
  %v227 = vld [vmem:[%s5 + $0x8] sm:$0xf]
  %v228 = vld [vmem:[%s5 + $0xc] sm:$0xf]
  %v229 = vld [vmem:[%s5 + $0x10] sm:$0xf]
  %v230 = vld [vmem:[%s5 + $0x14] sm:$0xf]
  %v231 = vld [vmem:[%s5 + $0x18] sm:$0xf]
  %v232 = vld [vmem:[%s5 + $0x1c] sm:$0xf]
  %v233 = vld [vmem:[%s5 + $0x20] sm:$0xf]
  %v234 = vld [vmem:[%s5 + $0x24] sm:$0xf]
  %v235 = vld [vmem:[%s5 + $0x28] sm:$0xf]
  %v236 = vld [vmem:[%s5 + $0x2c] sm:$0xf]
  %v237 = vld [vmem:[%s5 + $0x30] sm:$0xf]
  %v238 = vld [vmem:[%s5 + $0x34] sm:$0xf]
  %v239 = vld [vmem:[%s5 + $0x38] sm:$0xf]
  %v240 = vld [vmem:[%s5 + $0x3c] sm:$0xf]
  %v241 = vld [vmem:[%s6] sm:$0x1]
  %v243 = vlaneseq
  %v244 = vshrl.u32 %v243, 7
  %v245 = vsub.s32 0, %v244
  %v246 = vrot.slane %v241, %v245
  %v264 = vunpack.c.l.b16 %v225
  %v265 = vunpack.c.l.b16 %v226
  %v266 = vunpack.c.l.b16 %v227
  %v267 = vunpack.c.l.b16 %v228
  %v268 = vunpack.c.l.b16 %v229
  %v269 = vunpack.c.l.b16 %v230
  %v270 = vunpack.c.l.b16 %v231
  %v271 = vunpack.c.l.b16 %v232
  %v272 = vunpack.c.l.b16 %v233
  %v273 = vunpack.c.l.b16 %v234
  %v274 = vunpack.c.l.b16 %v235
  %v275 = vunpack.c.l.b16 %v236
  %v276 = vunpack.c.l.b16 %v237
  %v277 = vunpack.c.l.b16 %v238
  %v278 = vunpack.c.l.b16 %v239
  %v279 = vunpack.c.l.b16 %v240
  %v280 = vpack.c.b16 %v265, %v264
  %v281 = vpack.c.b16 %v267, %v266
  %v282 = vpack.c.b16 %v269, %v268
  %v283 = vpack.c.b16 %v271, %v270
  %v284 = vpack.c.b16 %v273, %v272
  %v285 = vpack.c.b16 %v275, %v274
  %v286 = vpack.c.b16 %v277, %v276
  %v287 = vpack.c.b16 %v279, %v278
  %296 = vmatprep.subr.bf16.mxu0 0
  %297 = vmatpush1.bf16.msra.mxu0 %v280
  %298 = vmatprep.subr.bf16.mxu0 0
  %299 = vmatpush1.bf16.msra.mxu0 %v281
  %300 = vmatprep.subr.bf16.mxu0 0
  %301 = vmatpush1.bf16.msra.mxu0 %v282
  %302 = vmatprep.subr.bf16.mxu0 0
  %303 = vmatpush1.bf16.msra.mxu0 %v283
  %304 = vmatprep.subr.bf16.mxu0 0
  %305 = vmatpush1.bf16.msra.mxu0 %v284
  %306 = vmatprep.subr.bf16.mxu0 0
  %307 = vmatpush1.bf16.msra.mxu0 %v285
  %308 = vmatprep.subr.bf16.mxu0 0
  %309 = vmatpush1.bf16.msra.mxu0 %v286
  %310 = vmatprep.subr.bf16.mxu0 0
  %311 = vmatpush1.bf16.msra.mxu0 %v287
  %312 = vmatprep.subr.bf16.mxu0 0
  %313 = vmatpush1.bf16.msra.mxu0 0
  %314 = vmatprep.subr.bf16.mxu0 0
  %315 = vmatpush1.bf16.msra.mxu0 0
  %316 = vmatprep.subr.bf16.mxu0 0
  %317 = vmatpush1.bf16.msra.mxu0 0
  %318 = vmatprep.subr.bf16.mxu0 0
  %319 = vmatpush1.bf16.msra.mxu0 0
  %320 = vmatprep.subr.bf16.mxu0 0
  %321 = vmatpush1.bf16.msra.mxu0 0
  %322 = vmatprep.subr.bf16.mxu0 0
  %323 = vmatpush1.bf16.msra.mxu0 0
  %324 = vmatprep.subr.bf16.mxu0 0
  %325 = vmatpush1.bf16.msra.mxu0 0
  %326 = vmatprep.subr.bf16.mxu0 0
  %327 = vmatpush1.bf16.msra.mxu0 0
  %328 = vmatprep.mubr.bf16.mxu0 0
  %329 = vmatmul.mubr.bf16.gmra.mrb[0].mxu0 %v223
  %v330 = vpop.f32.mrb[0].mxu0
  %v331 = vadd.f32 %v246, %v330
  %v332 = vpop.f32.mrb[0].mxu0
  %v333 = vpop.f32.mrb[0].mxu0
  %v334 = vadd.f32 %v246, %v333
  %v335 = vpop.f32.mrb[0].mxu0
  %336 = vmatprep.mubr.bf16.mxu0 0
  %337 = vmatmul.mubr.bf16.gmra.mrb[0].mxu0 %v224
  %v338 = vpop.f32.mrb[0].mxu0
  %v339 = vadd.f32 %v246, %v338
  %v340 = vpop.f32.mrb[0].mxu0
  %v341 = vpop.f32.mrb[0].mxu0
  %v342 = vadd.f32 %v246, %v341
  %v343 = vpop.f32.mrb[0].mxu0
  %344 = vdwg.mxu0
  %v345 = vadd.f32 %v27, %v331
  %v346 = vadd.f32 %v28, %v334
  %v347 = vadd.f32 %v29, %v339
  %v348 = vadd.f32 %v30, %v342
  %349 = vst.msk [vmem:[%s7] sm:$0xff] %vm33, %v345
  %350 = vst.msk [vmem:[%s7 + $0x8] sm:$0xff] %vm33, %v346
  %351 = vst.msk [vmem:[%s7 + $0x10] sm:$0xff] %vm33, %v347
  %352 = vst.msk [vmem:[%s7 + $0x18] sm:$0xff] %vm33, %v348
  // Predicated region
  $region30: #{transformer_forward.11} parent=0 // pred_check
    _
  $region31: #{transformer_forward.11} parent=0 // pred_check_branch
    %354 = sbr.rel (0) target = $region33
  $region32: #{transformer_forward.11} parent=0 // pred_region
    _
  $region33: #{transformer_forward.11} parent=0 // pred_fallthru
    _
  // Predicated region
  $region34: #{transformer_forward.11} parent=0 // pred_check
    _
  $region35: #{transformer_forward.11} parent=0 // pred_check_branch
    %356 = sbr.rel (0) target = $region37
  $region36: #{transformer_forward.11} parent=0 // pred_region
    _
  $region37: #{transformer_forward.11} parent=0 // pred_fallthru
    _

// kernel: transformer_forward.10
$region0: #{transformer_forward.10}
  #allocation0 [shape = 'u32[]', space=smem, size = 0x4, offset = 0x4, fixed_abs, tag = 'smem constant byte address 0x4 - core index']
  #allocation1 [shape = 'u32[144,128]{1,0:T(1,128)}', space=vmem, size = 0x12000, scoped, tag = 'internal scratch']
  %s0 = inlined_call_operand.vmem [shape: f32[2,16,96], index: 0, kind: input, shape index: {}, may-alias: {0,1}]
  %s1 = inlined_call_operand.vmem [shape: f32[2,16,96], index: 1, kind: input, shape index: {}, may-alias: {0,1}]
  %s2 = inlined_call_operand.vmem [shape: bf16[32,32], index: 2, kind: input, shape index: {}]
  %s3 = inlined_call_operand.vmem [shape: f32[1,32], index: 3, kind: input, shape index: {}]
  %s4 = inlined_call_operand.vmem [shape: f32[2,16,32], index: 4, kind: input, shape index: {}]
  %s5 = inlined_call_operand.vmem [shape: f32[2,16,32], index: 5, kind: output, shape index: {}]
  %s6 = sld [smem:[#allocation0]]
  $region53: #{transformer_forward.10} parent=0
    _
  %s8 = ssub.s32 1, %s6
  %s9 = scalar_select 0, %s8, %s6
  loop: start=0, step=1, limit=4
  $region2: #{transformer_forward.10} parent=0 // loop_pre_header
    _
  $region3: #{transformer_forward.10} parent=0 // loop_header
    %s11 = sphi 0, %s15
    %p12 = scmp.ge.s32.totalorder %s11, 4
    %s18 = sphi 0, %s30
    %s19 = sphi 0, %s26
    %s20 = sphi 0, %s18
    %s21 = sphi 0, %s19
    %s22 = sphi 0, %s20
    %s23 = sphi 0, %s21
    %s35 = sphi 0, %s37
    %s38 = sphi 0, %s35
    %s39 = sphi 0, %s38
    %s55 = sphi 0, %s39
    %s61 = sphi 0, %s63
    %s64 = sphi 0, %s61
    %s65 = sphi 0, %s64
    %s81 = sphi 0, %s65
    %s85 = sphi 0, %s85
    %s87 = sphi 0, %s85
    %s88 = sphi 0, %s87
    %s102 = sphi 0, %s88
    %s106 = sphi 0, %s106
    %s108 = sphi 0, %s106
    %s109 = sphi 0, %s108
    %s123 = sphi 0, %s109
    %s131 = sphi 0, %s133
    %s134 = sphi 0, %s131
    %s135 = sphi 0, %s134
    %s151 = sphi 0, %s135
    %s159 = sphi 0, %s161
    %s162 = sphi 0, %s159
    %s163 = sphi 0, %s162
    %s179 = sphi 0, %s163
  $region4: #{transformer_forward.10} parent=0 // loop_header_branch
    %14 = sbr.rel (%p12) target = $region8
  $region5: #{transformer_forward.10} parent=0 // loop_body
    %s16 = ssub.s32 %s11, 1
    %s17 = ssub.s32 %s11, 2
    %s24 = sadd.s32 1, %s19
    %p25 = scmp.ge.s32.totalorder %s24, 1
    %s26 = scalar_select %p25, 0, %s24
    %s27 = sadd.s32 1, %s18
    %s28 = scalar_select %p25, %s27, %s18
    %p29 = scmp.ge.s32.totalorder %s28, 2
    %s30 = scalar_select %p29, 0, %s28
    %s31 = ssub.s32 %s18, %s30
    %s32 = ssub.s32 %s19, %s26
    %s33 = sor.u32 %s31, %s32
    %p34 = scmp.eq.s32.totalorder %s33, 0
    %s36 = sadd.s32 %s35, 1
    %s37 = scalar_select %p34, %s35, %s36
    %p40 = pneg %p34
    %p41 = scmp.eq.s32.totalorder %s11, 1
    %p42 = por %p40, %p41
    %p43 = scmp.ne.s32.totalorder %s35, %s38
    %p44 = scmp.eq.s32.totalorder %s11, 0
    %p45 = por %p43, %p44
    %p46 = scmp.ne.s32.totalorder %s35, %s38
    %p47 = scmp.eq.s32.totalorder %s16, 1
    %p48 = por %p46, %p47
    %p49 = scmp.ne.s32.totalorder %s38, %s39
    %p50 = scmp.eq.s32.totalorder %s16, 0
    %p51 = por %p49, %p50
    %p52 = scmp.ne.s32.totalorder %s38, %s39
    %p53 = scmp.eq.s32.totalorder %s17, 1
    %p54 = por %p52, %p53
    %p56 = scmp.ne.s32.totalorder %s39, %s55
    %p57 = scmp.eq.s32.totalorder %s17, 0
    %p58 = por %p56, %p57
    %s59 = ssub.s32 %s18, %s30
    %p60 = scmp.eq.s32.totalorder %s59, 0
    %s62 = sadd.s32 %s61, 1
    %s63 = scalar_select %p60, %s61, %s62
    %p66 = pneg %p60
    %p67 = scmp.eq.s32.totalorder %s11, 1
    %p68 = por %p66, %p67
    %p69 = scmp.ne.s32.totalorder %s61, %s64
    %p70 = scmp.eq.s32.totalorder %s11, 0
    %p71 = por %p69, %p70
    %p72 = scmp.ne.s32.totalorder %s61, %s64
    %p73 = scmp.eq.s32.totalorder %s16, 1
    %p74 = por %p72, %p73
    %p75 = scmp.ne.s32.totalorder %s64, %s65
    %p76 = scmp.eq.s32.totalorder %s16, 0
    %p77 = por %p75, %p76
    %p78 = scmp.ne.s32.totalorder %s64, %s65
    %p79 = scmp.eq.s32.totalorder %s17, 1
    %p80 = por %p78, %p79
    %p82 = scmp.ne.s32.totalorder %s65, %s81
    %p83 = scmp.eq.s32.totalorder %s17, 0
    %p84 = por %p82, %p83
    %s86 = sadd.s32 %s85, 1
    %p89 = scmp.eq.s32.totalorder %s11, 1
    %p90 = scmp.ne.s32.totalorder %s85, %s87
    %p91 = scmp.eq.s32.totalorder %s11, 0
    %p92 = por %p90, %p91
    %p93 = scmp.ne.s32.totalorder %s85, %s87
    %p94 = scmp.eq.s32.totalorder %s16, 1
    %p95 = por %p93, %p94
    %p96 = scmp.ne.s32.totalorder %s87, %s88
    %p97 = scmp.eq.s32.totalorder %s16, 0
    %p98 = por %p96, %p97
    %p99 = scmp.ne.s32.totalorder %s87, %s88
    %p100 = scmp.eq.s32.totalorder %s17, 1
    %p101 = por %p99, %p100
    %p103 = scmp.ne.s32.totalorder %s88, %s102
    %p104 = scmp.eq.s32.totalorder %s17, 0
    %p105 = por %p103, %p104
    %s107 = sadd.s32 %s106, 1
    %p110 = scmp.eq.s32.totalorder %s11, 1
    %p111 = scmp.ne.s32.totalorder %s106, %s108
    %p112 = scmp.eq.s32.totalorder %s11, 0
    %p113 = por %p111, %p112
    %p114 = scmp.ne.s32.totalorder %s106, %s108
    %p115 = scmp.eq.s32.totalorder %s16, 1
    %p116 = por %p114, %p115
    %p117 = scmp.ne.s32.totalorder %s108, %s109
    %p118 = scmp.eq.s32.totalorder %s16, 0
    %p119 = por %p117, %p118
    %p120 = scmp.ne.s32.totalorder %s108, %s109
    %p121 = scmp.eq.s32.totalorder %s17, 1
    %p122 = por %p120, %p121
    %p124 = scmp.ne.s32.totalorder %s109, %s123
    %p125 = scmp.eq.s32.totalorder %s17, 0
    %p126 = por %p124, %p125
    %s127 = ssub.s32 %s18, %s30
    %s128 = ssub.s32 %s19, %s26
    %s129 = sor.u32 %s127, %s128
    %p130 = scmp.eq.s32.totalorder %s129, 0
    %s132 = sadd.s32 %s131, 1
    %s133 = scalar_select %p130, %s131, %s132
    %p136 = pneg %p130
    %p137 = scmp.eq.s32.totalorder %s11, 1
    %p138 = por %p136, %p137
    %p139 = scmp.ne.s32.totalorder %s131, %s134
    %p140 = scmp.eq.s32.totalorder %s11, 0
    %p141 = por %p139, %p140
    %p142 = scmp.ne.s32.totalorder %s131, %s134
    %p143 = scmp.eq.s32.totalorder %s16, 1
    %p144 = por %p142, %p143
    %p145 = scmp.ne.s32.totalorder %s134, %s135
    %p146 = scmp.eq.s32.totalorder %s16, 0
    %p147 = por %p145, %p146
    %p148 = scmp.ne.s32.totalorder %s134, %s135
    %p149 = scmp.eq.s32.totalorder %s17, 1
    %p150 = por %p148, %p149
    %p152 = scmp.ne.s32.totalorder %s135, %s151
    %p153 = scmp.eq.s32.totalorder %s17, 0
    %p154 = por %p152, %p153
    %s155 = ssub.s32 %s18, %s30
    %s156 = ssub.s32 %s19, %s26
    %s157 = sor.u32 %s155, %s156
    %p158 = scmp.eq.s32.totalorder %s157, 0
    %s160 = sadd.s32 %s159, 1
    %s161 = scalar_select %p158, %s159, %s160
    %p164 = pneg %p158
    %p165 = scmp.eq.s32.totalorder %s11, 1
    %p166 = por %p164, %p165
    %p167 = scmp.ne.s32.totalorder %s159, %s162
    %p168 = scmp.eq.s32.totalorder %s11, 0
    %p169 = por %p167, %p168
    %p170 = scmp.ne.s32.totalorder %s159, %s162
    %p171 = scmp.eq.s32.totalorder %s16, 1
    %p172 = por %p170, %p171
    %p173 = scmp.ne.s32.totalorder %s162, %s163
    %p174 = scmp.eq.s32.totalorder %s16, 0
    %p175 = por %p173, %p174
    %p176 = scmp.ne.s32.totalorder %s162, %s163
    %p177 = scmp.eq.s32.totalorder %s17, 1
    %p178 = por %p176, %p177
    %p180 = scmp.ne.s32.totalorder %s163, %s179
    %p181 = scmp.eq.s32.totalorder %s17, 0
    %p182 = por %p180, %p181
    %p183 = scmp.le.s32.totalorder 1, %s11
    %p184 = scmp.lt.s32.totalorder %s11, 3
    %p185 = pnand %p183, %p184
    %p186 = pneg %p185
    // Predicated region
    $region9: #{transformer_forward.10} parent=5 // pred_check
      _
    $region10: #{transformer_forward.10} parent=5 // pred_check_branch
      %188 = sbr.rel (%p185) target = $region12
    $region11: #{transformer_forward.10} parent=5 // pred_region
      %s189 = ssub.s32 %s11, 1
      // Predicated region
      $region13: #{transformer_forward.10} parent=11 // pred_check
        %p190 = pneg %p98
      $region14: #{transformer_forward.10} parent=11 // pred_check_branch
        %192 = sbr.rel (%p190) target = $region16
      $region15: #{transformer_forward.10} parent=11 // pred_region
        _
      $region16: #{transformer_forward.10} parent=11 // pred_fallthru
        _
      // Predicated region
      $region17: #{transformer_forward.10} parent=11 // pred_check
        %p193 = pneg %p119
      $region18: #{transformer_forward.10} parent=11 // pred_check_branch
        %195 = sbr.rel (%p193) target = $region20
      $region19: #{transformer_forward.10} parent=11 // pred_region
        _
      $region20: #{transformer_forward.10} parent=11 // pred_fallthru
        _
    $region12: #{transformer_forward.10} parent=5 // pred_fallthru
      _
    %p196 = scmp.lt.s32.totalorder %s11, 2
    // Predicated region
    $region21: #{transformer_forward.10} parent=5 // pred_check
      %p197 = pneg %p196
    $region22: #{transformer_forward.10} parent=5 // pred_check_branch
      %199 = sbr.rel (%p197) target = $region24
    $region23: #{transformer_forward.10} parent=5 // pred_region
      // Predicated region
      $region25: #{transformer_forward.10} parent=23 // pred_check
        %p200 = pneg %p45
      $region26: #{transformer_forward.10} parent=23 // pred_check_branch
        %202 = sbr.rel (%p200) target = $region28
      $region27: #{transformer_forward.10} parent=23 // pred_region
        %s203 = smul.u32 2, %s19
        %p204 = scmp.lt.s32.totalorder %s18, 1
        %s205 = scalar_select %p204, %s18, 1
        %p206 = scmp.lt.s32.totalorder %s203, 1
        %s207 = scalar_select %p206, %s203, 1
        %s208 = smul.addr %s205, 2
        %s209 = sadd.s32 %s207, %s208
        %s210 = smul.addr %s209, 8
        %s211 = scalar_lea.vmem %s0, %s210
        %s212 = smul.u32 2, %s19
      $region28: #{transformer_forward.10} parent=23 // pred_fallthru
        _
      // Predicated region
      $region29: #{transformer_forward.10} parent=23 // pred_check
        %p213 = pneg %p71
      $region30: #{transformer_forward.10} parent=23 // pred_check_branch
        %215 = sbr.rel (%p213) target = $region32
      $region31: #{transformer_forward.10} parent=23 // pred_region
        %p216 = scmp.lt.s32.totalorder %s18, 1
        %s217 = scalar_select %p216, %s18, 1
        %s218 = smul.addr %s217, 2
        %s219 = smul.addr %s218, 8
        %s220 = scalar_lea.vmem %s1, %s219
      $region32: #{transformer_forward.10} parent=23 // pred_fallthru
        _
      // Predicated region
      $region33: #{transformer_forward.10} parent=23 // pred_check
        %p221 = pneg %p141
      $region34: #{transformer_forward.10} parent=23 // pred_check_branch
        %223 = sbr.rel (%p221) target = $region36
      $region35: #{transformer_forward.10} parent=23 // pred_region
        %s224 = smul.u32 2, %s19
        %p225 = scmp.lt.s32.totalorder %s18, 1
        %s226 = scalar_select %p225, %s18, 1
        %p227 = scmp.lt.s32.totalorder %s224, 1
        %s228 = scalar_select %p227, %s224, 1
        %s229 = smul.addr %s226, 2
        %s230 = sadd.s32 %s228, %s229
        %s231 = smul.addr %s230, 8
        %s232 = scalar_lea.vmem %s4, %s231
        %s233 = smul.u32 2, %s19
      $region36: #{transformer_forward.10} parent=23 // pred_fallthru
        _
    $region24: #{transformer_forward.10} parent=5 // pred_fallthru
      _
    %p234 = scmp.le.s32.totalorder 1, %s11
    %p235 = scmp.lt.s32.totalorder %s11, 3
    %p236 = pnand %p234, %p235
    %p237 = pneg %p236
    // Predicated region
    $region37: #{transformer_forward.10} parent=5 // pred_check
      _
    $region38: #{transformer_forward.10} parent=5 // pred_check_branch
      %239 = sbr.rel (%p236) target = $region40
    $region39: #{transformer_forward.10} parent=5 // pred_region
      %s240 = ssub.s32 %s11, 1
      %s241 = smul.u32 2, %s21
      %p242 = scmp.lt.s32.totalorder %s20, 1
      %s243 = scalar_select %p242, %s20, 1
      %p244 = scmp.lt.s32.totalorder %s241, 1
      %s245 = scalar_select %p244, %s241, 1
      %s246 = smul.addr %s243, 2
      %s247 = sadd.s32 %s245, %s246
      %s248 = smul.addr %s247, 8
      %s249 = scalar_lea.vmem %s0, %s248
      %p250 = pneg %p51
      %p251 = pneg %p48
      %p252 = scmp.lt.s32.totalorder %s20, 1
      %s253 = scalar_select %p252, %s20, 1
      %s254 = smul.addr %s253, 2
      %s255 = smul.addr %s254, 8
      %s256 = scalar_lea.vmem %s1, %s255
      %p257 = pneg %p77
      %p258 = pneg %p74
      %p259 = pneg %p98
      %p260 = pneg %p95
      %p261 = pneg %p119
      %p262 = pneg %p116
      %s263 = smul.u32 2, %s21
      %p264 = scmp.lt.s32.totalorder %s20, 1
      %s265 = scalar_select %p264, %s20, 1
      %p266 = scmp.lt.s32.totalorder %s263, 1
      %s267 = scalar_select %p266, %s263, 1
      %s268 = smul.addr %s265, 2
      %s269 = sadd.s32 %s267, %s268
      %s270 = smul.addr %s269, 8
      %s271 = scalar_lea.vmem %s4, %s270
      %p272 = pneg %p147
      %p273 = pneg %p144
      %p274 = pneg %p175
      %p275 = pneg %p172
      %s276 = smul.u32 2, %s21
      %p277 = scmp.lt.s32.totalorder %s20, 1
      %s278 = scalar_select %p277, %s20, 1
      %p279 = scmp.lt.s32.totalorder %s276, 1
      %s280 = scalar_select %p279, %s276, 1
      %s281 = smul.addr %s278, 2
      %s282 = sadd.s32 %s280, %s281
      %s283 = smul.addr %s282, 8
      %s284 = scalar_lea.vmem %s5, %s283
      %s285 = smul.u32 2, %s21
      %p286 = scmp.lt.s32.totalorder %s20, 1
      %s287 = scalar_select %p286, %s20, 1
      %p288 = scmp.lt.s32.totalorder %s285, 1
      %s289 = scalar_select %p288, %s285, 1
      %s290 = smul.addr %s287, 2
      %s291 = sadd.s32 %s289, %s290
      %s292 = smul.addr %s291, 8
      %s293 = scalar_lea.vmem %s0, %s292
      %s294 = smul.u32 2, %s21
      %p295 = scmp.lt.s32.totalorder %s20, 1
      %s296 = scalar_select %p295, %s20, 1
      %s297 = smul.addr %s296, 2
      %s298 = smul.addr %s297, 8
      %s299 = scalar_lea.vmem %s1, %s298
      %s300 = smul.u32 2, %s21
      %p301 = scmp.lt.s32.totalorder %s20, 1
      %s302 = scalar_select %p301, %s20, 1
      %p303 = scmp.lt.s32.totalorder %s300, 1
      %s304 = scalar_select %p303, %s300, 1
      %s305 = smul.addr %s302, 2
      %s306 = sadd.s32 %s304, %s305
      %s307 = smul.addr %s306, 8
      %s308 = scalar_lea.vmem %s4, %s307
      %s309 = smul.u32 2, %s21
      %s310 = smul.u32 2, %s21
      %p311 = scmp.lt.s32.totalorder %s20, 1
      %s312 = scalar_select %p311, %s20, 1
      %p313 = scmp.lt.s32.totalorder %s310, 1
      %s314 = scalar_select %p313, %s310, 1
      %s315 = smul.addr %s312, 2
      %s316 = sadd.s32 %s314, %s315
      %s317 = smul.addr %s316, 8
      %s318 = scalar_lea.vmem %s5, %s317
      %s319 = smul.u32 2, %s21
      %v321 = vld [vmem:[%s293] sm:$0xff]
      %v322 = vld [vmem:[%s293 + $0x8] sm:$0xff]
      %v323 = vld [vmem:[%s299] sm:$0xff]
      %v324 = vld [vmem:[%s299 + $0x8] sm:$0xff]
      %s325 = smul.u32 %s21, 16
      %v326 = vlaneseq
      %v327 = vshrl.u32 %v326, 7
      %v328 = vadd.s32 %v327, 8
      %v329 = vstv %s325
      %v330 = vadd.s32 %v329, %v327
      %v331 = vadd.s32 %v329, %v328
      %v332 = vlaneseq
      %v333 = vand.u32 %v332, 127
      %vm334 = vcmp.le.s32.totalorder %v333, %v330
      %vm335 = vcmp.le.s32.totalorder %v333, %v331
      %v336 = vmul.f32 %v321, 0.35355338
      %v337 = vmul.f32 %v322, 0.35355338
      %v338 = vpack.c.bf16 %v337, %v336
      %v339 = vpack.c.bf16 %v324, %v323
      %341 = vrot.lane.b32.xlu0 %v339, 96
      %v342 = vpop.permute.xlu0 %341
      %vm343 = vcmask 64512
      %v345 = vsel %vm343, %v338, 0
      %v348 = vsel %vm343, %v342, 0
      %350 = vmatprep.subr.bf16.mxu0 0
      %351 = vmatpush1.bf16.xpose.msra.mxu0 %v348
      %352 = vmatprep.subr.bf16.mxu0 0
      %353 = vmatpush1.bf16.xpose.msra.mxu0 0
      %354 = vmatprep.subr.bf16.mxu0 0
      %355 = vmatpush1.bf16.xpose.msra.mxu0 0
      %356 = vmatprep.subr.bf16.mxu0 0
      %357 = vmatpush1.bf16.xpose.msra.mxu0 0
      %358 = vmatprep.subr.bf16.mxu0 0
      %359 = vmatpush1.bf16.xpose.msra.mxu0 0
      %360 = vmatprep.subr.bf16.mxu0 0
      %361 = vmatpush1.bf16.xpose.msra.mxu0 0
      %362 = vmatprep.subr.bf16.mxu0 0
      %363 = vmatpush1.bf16.xpose.msra.mxu0 0
      %364 = vmatprep.subr.bf16.mxu0 0
      %365 = vmatpush1.bf16.xpose.msra.mxu0 0
      %366 = vmatprep.subr.bf16.mxu0 0
      %367 = vmatpush1.bf16.xpose.msra.mxu0 0
      %368 = vmatprep.subr.bf16.mxu0 0
      %369 = vmatpush1.bf16.xpose.msra.mxu0 0
      %370 = vmatprep.subr.bf16.mxu0 0
      %371 = vmatpush1.bf16.xpose.msra.mxu0 0
      %372 = vmatprep.subr.bf16.mxu0 0
      %373 = vmatpush1.bf16.xpose.msra.mxu0 0
      %374 = vmatprep.subr.bf16.mxu0 0
      %375 = vmatpush1.bf16.xpose.msra.mxu0 0
      %376 = vmatprep.subr.bf16.mxu0 0
      %377 = vmatpush1.bf16.xpose.msra.mxu0 0
      %378 = vmatprep.subr.bf16.mxu0 0
      %379 = vmatpush1.bf16.xpose.msra.mxu0 0
      %380 = vmatprep.subr.bf16.mxu0 0
      %381 = vmatpush1.bf16.xpose.msra.mxu0 0
      %382 = vmatprep.mubr.bf16.mxu0 0
      %383 = vmatmul.mubr.bf16.gmra.mrb[0].mxu0 %v345
      %v384 = vpop.f32.mrb[0].mxu0
      %v385 = vadd.f32 0.0, %v384
      %v386 = vpop.f32.mrb[0].mxu0
      %v387 = vpop.f32.mrb[0].mxu0
      %v388 = vadd.f32 0.0, %v387
      %v389 = vpop.f32.mrb[0].mxu0
      %390 = vdwg.mxu0
      %v391 = vsel %vm334, %v385, -1e+30
      %v392 = vsel %vm335, %v388, -1e+30
      %vm393 = vcmask 130048
      %v394 = vsel %vm393, %v391, -inf
      %395 = vmax.xlane.f32.xlu0 %v394
      %v396 = vpop.xlane.xlu0 %395
      %v397 = vsel %vm393, %v392, -inf
      %398 = vmax.xlane.f32.xlu0 %v397
      %v399 = vpop.xlane.xlu0 %398
      %v400 = vsub.f32 %v391, %v396
      %v401 = vsub.f32 %v392, %v399
      %v402 = vmul.f32 %v400, 1.442695
      %v403 = vpow.pop %v402
      %v404 = vmul.f32 %v401, 1.442695
      %v405 = vpow.pop %v404
      %v406 = vsel %vm393, %v403, 0.0
      %407 = vadd.xlane.f32.xlu0 %v406
      %v408 = vpop.xlane.xlu0 %407
      %v409 = vsel %vm393, %v405, 0.0
      %410 = vadd.xlane.f32.xlu0 %v409
      %v411 = vpop.xlane.xlu0 %410
      %v412 = vpack.c.bf16 %v405, %v403
      %413 = vrot.lane.b32.xlu0 %v339, 64
      %v414 = vpop.permute.xlu0 %413
      %v417 = vsel %vm393, %v412, 0
      %419 = vmatprep.subr.bf16.mxu0 0
      %420 = vmatpush1.bf16.msra.mxu0 %v414
      %421 = vmatprep.subr.bf16.mxu0 0
      %422 = vmatpush1.bf16.msra.mxu0 0
      %423 = vmatprep.subr.bf16.mxu0 0
      %424 = vmatpush1.bf16.msra.mxu0 0
      %425 = vmatprep.subr.bf16.mxu0 0
      %426 = vmatpush1.bf16.msra.mxu0 0
      %427 = vmatprep.subr.bf16.mxu0 0
      %428 = vmatpush1.bf16.msra.mxu0 0
      %429 = vmatprep.subr.bf16.mxu0 0
      %430 = vmatpush1.bf16.msra.mxu0 0
      %431 = vmatprep.subr.bf16.mxu0 0
      %432 = vmatpush1.bf16.msra.mxu0 0
      %433 = vmatprep.subr.bf16.mxu0 0
      %434 = vmatpush1.bf16.msra.mxu0 0
      %435 = vmatprep.subr.bf16.mxu0 0
      %436 = vmatpush1.bf16.msra.mxu0 0
      %437 = vmatprep.subr.bf16.mxu0 0
      %438 = vmatpush1.bf16.msra.mxu0 0
      %439 = vmatprep.subr.bf16.mxu0 0
      %440 = vmatpush1.bf16.msra.mxu0 0
      %441 = vmatprep.subr.bf16.mxu0 0
      %442 = vmatpush1.bf16.msra.mxu0 0
      %443 = vmatprep.subr.bf16.mxu0 0
      %444 = vmatpush1.bf16.msra.mxu0 0
      %445 = vmatprep.subr.bf16.mxu0 0
      %446 = vmatpush1.bf16.msra.mxu0 0
      %447 = vmatprep.subr.bf16.mxu0 0
      %448 = vmatpush1.bf16.msra.mxu0 0
      %449 = vmatprep.subr.bf16.mxu0 0
      %450 = vmatpush1.bf16.msra.mxu0 0
      %451 = vmatprep.mubr.bf16.mxu0 0
      %452 = vmatmul.mubr.bf16.gmra.mrb[0].mxu0 %v417
      %v453 = vpop.f32.mrb[0].mxu0
      %v454 = vadd.f32 0.0, %v453
      %v455 = vpop.f32.mrb[0].mxu0
      %v456 = vpop.f32.mrb[0].mxu0
      %v457 = vadd.f32 0.0, %v456
      %v458 = vpop.f32.mrb[0].mxu0
      %459 = vdwg.mxu0
      %v460 = vrcp.pop %v408
      %v461 = vrcp.pop %v411
      %v462 = vmul.f32 %v454, %v460
      %v463 = vmul.f32 %v457, %v461
      %465 = vrot.lane.b32.xlu0 %v338, 120
      %v466 = vpop.permute.xlu0 %465
      %467 = vrot.lane.b32.xlu0 %v339, 88
      %v468 = vpop.permute.xlu0 %467
      %v470 = vsel %vm343, %v466, 0
      %v473 = vsel %vm343, %v468, 0
      %475 = vmatprep.subr.bf16.mxu0 0
      %476 = vmatpush1.bf16.xpose.msra.mxu0 %v473
      %477 = vmatprep.subr.bf16.mxu0 0
      %478 = vmatpush1.bf16.xpose.msra.mxu0 0
      %479 = vmatprep.subr.bf16.mxu0 0
      %480 = vmatpush1.bf16.xpose.msra.mxu0 0
      %481 = vmatprep.subr.bf16.mxu0 0
      %482 = vmatpush1.bf16.xpose.msra.mxu0 0
      %483 = vmatprep.subr.bf16.mxu0 0
      %484 = vmatpush1.bf16.xpose.msra.mxu0 0
      %485 = vmatprep.subr.bf16.mxu0 0
      %486 = vmatpush1.bf16.xpose.msra.mxu0 0
      %487 = vmatprep.subr.bf16.mxu0 0
      %488 = vmatpush1.bf16.xpose.msra.mxu0 0
      %489 = vmatprep.subr.bf16.mxu0 0
      %490 = vmatpush1.bf16.xpose.msra.mxu0 0
      %491 = vmatprep.subr.bf16.mxu0 0
      %492 = vmatpush1.bf16.xpose.msra.mxu0 0
      %493 = vmatprep.subr.bf16.mxu0 0
      %494 = vmatpush1.bf16.xpose.msra.mxu0 0
      %495 = vmatprep.subr.bf16.mxu0 0
      %496 = vmatpush1.bf16.xpose.msra.mxu0 0
      %497 = vmatprep.subr.bf16.mxu0 0
      %498 = vmatpush1.bf16.xpose.msra.mxu0 0
      %499 = vmatprep.subr.bf16.mxu0 0
      %500 = vmatpush1.bf16.xpose.msra.mxu0 0
      %501 = vmatprep.subr.bf16.mxu0 0
      %502 = vmatpush1.bf16.xpose.msra.mxu0 0
      %503 = vmatprep.subr.bf16.mxu0 0
      %504 = vmatpush1.bf16.xpose.msra.mxu0 0
      %505 = vmatprep.subr.bf16.mxu0 0
      %506 = vmatpush1.bf16.xpose.msra.mxu0 0
      %507 = vmatprep.mubr.bf16.mxu0 0
      %508 = vmatmul.mubr.bf16.gmra.mrb[0].mxu0 %v470
      %v509 = vpop.f32.mrb[0].mxu0
      %v510 = vadd.f32 0.0, %v509
      %v511 = vpop.f32.mrb[0].mxu0
      %v512 = vpop.f32.mrb[0].mxu0
      %v513 = vadd.f32 0.0, %v512
      %v514 = vpop.f32.mrb[0].mxu0
      %515 = vdwg.mxu0
      %v516 = vsel %vm334, %v510, -1e+30
      %v517 = vsel %vm335, %v513, -1e+30
      %v518 = vsel %vm393, %v516, -inf
      %519 = vmax.xlane.f32.xlu0 %v518
      %v520 = vpop.xlane.xlu0 %519
      %v521 = vsel %vm393, %v517, -inf
      %522 = vmax.xlane.f32.xlu0 %v521
      %v523 = vpop.xlane.xlu0 %522
      %v524 = vsub.f32 %v516, %v520
      %v525 = vsub.f32 %v517, %v523
      %v526 = vmul.f32 %v524, 1.442695
      %v527 = vpow.pop %v526
      %v528 = vmul.f32 %v525, 1.442695
      %v529 = vpow.pop %v528
      %v530 = vsel %vm393, %v527, 0.0
      %531 = vadd.xlane.f32.xlu0 %v530
      %v532 = vpop.xlane.xlu0 %531
      %v533 = vsel %vm393, %v529, 0.0
      %534 = vadd.xlane.f32.xlu0 %v533
      %v535 = vpop.xlane.xlu0 %534
      %v536 = vpack.c.bf16 %v529, %v527
      %537 = vrot.lane.b32.xlu0 %v339, 56
      %v538 = vpop.permute.xlu0 %537
      %v541 = vsel %vm393, %v536, 0
      %543 = vmatprep.subr.bf16.mxu0 0
      %544 = vmatpush1.bf16.msra.mxu0 %v538
      %545 = vmatprep.subr.bf16.mxu0 0
      %546 = vmatpush1.bf16.msra.mxu0 0
      %547 = vmatprep.subr.bf16.mxu0 0
      %548 = vmatpush1.bf16.msra.mxu0 0
      %549 = vmatprep.subr.bf16.mxu0 0
      %550 = vmatpush1.bf16.msra.mxu0 0
      %551 = vmatprep.subr.bf16.mxu0 0
      %552 = vmatpush1.bf16.msra.mxu0 0
      %553 = vmatprep.subr.bf16.mxu0 0
      %554 = vmatpush1.bf16.msra.mxu0 0
      %555 = vmatprep.subr.bf16.mxu0 0
      %556 = vmatpush1.bf16.msra.mxu0 0
      %557 = vmatprep.subr.bf16.mxu0 0
      %558 = vmatpush1.bf16.msra.mxu0 0
      %559 = vmatprep.subr.bf16.mxu0 0
      %560 = vmatpush1.bf16.msra.mxu0 0
      %561 = vmatprep.subr.bf16.mxu0 0
      %562 = vmatpush1.bf16.msra.mxu0 0
      %563 = vmatprep.subr.bf16.mxu0 0
      %564 = vmatpush1.bf16.msra.mxu0 0
      %565 = vmatprep.subr.bf16.mxu0 0
      %566 = vmatpush1.bf16.msra.mxu0 0
      %567 = vmatprep.subr.bf16.mxu0 0
      %568 = vmatpush1.bf16.msra.mxu0 0
      %569 = vmatprep.subr.bf16.mxu0 0
      %570 = vmatpush1.bf16.msra.mxu0 0
      %571 = vmatprep.subr.bf16.mxu0 0
      %572 = vmatpush1.bf16.msra.mxu0 0
      %573 = vmatprep.subr.bf16.mxu0 0
      %574 = vmatpush1.bf16.msra.mxu0 0
      %575 = vmatprep.mubr.bf16.mxu0 0
      %576 = vmatmul.mubr.bf16.gmra.mrb[0].mxu0 %v541
      %v577 = vpop.f32.mrb[0].mxu0
      %v578 = vadd.f32 0.0, %v577
      %v579 = vpop.f32.mrb[0].mxu0
      %v580 = vpop.f32.mrb[0].mxu0
      %v581 = vadd.f32 0.0, %v580
      %v582 = vpop.f32.mrb[0].mxu0
      %583 = vdwg.mxu0
      %v584 = vrcp.pop %v532
      %v585 = vrcp.pop %v535
      %v586 = vmul.f32 %v578, %v584
      %v587 = vmul.f32 %v581, %v585
      %588 = vrot.lane.b32.xlu0 %v338, 112
      %v589 = vpop.permute.xlu0 %588
      %590 = vrot.lane.b32.xlu0 %v339, 80
      %v591 = vpop.permute.xlu0 %590
      %v593 = vsel %vm343, %v589, 0
      %v596 = vsel %vm343, %v591, 0
      %598 = vmatprep.subr.bf16.mxu0 0
      %599 = vmatpush1.bf16.xpose.msra.mxu0 %v596
      %600 = vmatprep.subr.bf16.mxu0 0
      %601 = vmatpush1.bf16.xpose.msra.mxu0 0
      %602 = vmatprep.subr.bf16.mxu0 0
      %603 = vmatpush1.bf16.xpose.msra.mxu0 0
      %604 = vmatprep.subr.bf16.mxu0 0
      %605 = vmatpush1.bf16.xpose.msra.mxu0 0
      %606 = vmatprep.subr.bf16.mxu0 0
      %607 = vmatpush1.bf16.xpose.msra.mxu0 0
      %608 = vmatprep.subr.bf16.mxu0 0
      %609 = vmatpush1.bf16.xpose.msra.mxu0 0
      %610 = vmatprep.subr.bf16.mxu0 0
      %611 = vmatpush1.bf16.xpose.msra.mxu0 0
      %612 = vmatprep.subr.bf16.mxu0 0
      %613 = vmatpush1.bf16.xpose.msra.mxu0 0
      %614 = vmatprep.subr.bf16.mxu0 0
      %615 = vmatpush1.bf16.xpose.msra.mxu0 0
      %616 = vmatprep.subr.bf16.mxu0 0
      %617 = vmatpush1.bf16.xpose.msra.mxu0 0
      %618 = vmatprep.subr.bf16.mxu0 0
      %619 = vmatpush1.bf16.xpose.msra.mxu0 0
      %620 = vmatprep.subr.bf16.mxu0 0
      %621 = vmatpush1.bf16.xpose.msra.mxu0 0
      %622 = vmatprep.subr.bf16.mxu0 0
      %623 = vmatpush1.bf16.xpose.msra.mxu0 0
      %624 = vmatprep.subr.bf16.mxu0 0
      %625 = vmatpush1.bf16.xpose.msra.mxu0 0
      %626 = vmatprep.subr.bf16.mxu0 0
      %627 = vmatpush1.bf16.xpose.msra.mxu0 0
      %628 = vmatprep.subr.bf16.mxu0 0
      %629 = vmatpush1.bf16.xpose.msra.mxu0 0
      %630 = vmatprep.mubr.bf16.mxu0 0
      %631 = vmatmul.mubr.bf16.gmra.mrb[0].mxu0 %v593
      %v632 = vpop.f32.mrb[0].mxu0
      %v633 = vadd.f32 0.0, %v632
      %v634 = vpop.f32.mrb[0].mxu0
      %v635 = vpop.f32.mrb[0].mxu0
      %v636 = vadd.f32 0.0, %v635
      %v637 = vpop.f32.mrb[0].mxu0
      %638 = vdwg.mxu0
      %v639 = vsel %vm334, %v633, -1e+30
      %v640 = vsel %vm335, %v636, -1e+30
      %v641 = vsel %vm393, %v639, -inf
      %642 = vmax.xlane.f32.xlu0 %v641
      %v643 = vpop.xlane.xlu0 %642
      %v644 = vsel %vm393, %v640, -inf
      %645 = vmax.xlane.f32.xlu0 %v644
      %v646 = vpop.xlane.xlu0 %645
      %v647 = vsub.f32 %v639, %v643
      %v648 = vsub.f32 %v640, %v646
      %v649 = vmul.f32 %v647, 1.442695
      %v650 = vpow.pop %v649
      %v651 = vmul.f32 %v648, 1.442695
      %v652 = vpow.pop %v651
      %v653 = vsel %vm393, %v650, 0.0
      %654 = vadd.xlane.f32.xlu0 %v653
      %v655 = vpop.xlane.xlu0 %654
      %v656 = vsel %vm393, %v652, 0.0
      %657 = vadd.xlane.f32.xlu0 %v656
      %v658 = vpop.xlane.xlu0 %657
      %v659 = vpack.c.bf16 %v652, %v650
      %660 = vrot.lane.b32.xlu0 %v339, 48
      %v661 = vpop.permute.xlu0 %660
      %v664 = vsel %vm393, %v659, 0
      %666 = vmatprep.subr.bf16.mxu0 0
      %667 = vmatpush1.bf16.msra.mxu0 %v661
      %668 = vmatprep.subr.bf16.mxu0 0
      %669 = vmatpush1.bf16.msra.mxu0 0
      %670 = vmatprep.subr.bf16.mxu0 0
      %671 = vmatpush1.bf16.msra.mxu0 0
      %672 = vmatprep.subr.bf16.mxu0 0
      %673 = vmatpush1.bf16.msra.mxu0 0
      %674 = vmatprep.subr.bf16.mxu0 0
      %675 = vmatpush1.bf16.msra.mxu0 0
      %676 = vmatprep.subr.bf16.mxu0 0
      %677 = vmatpush1.bf16.msra.mxu0 0
      %678 = vmatprep.subr.bf16.mxu0 0
      %679 = vmatpush1.bf16.msra.mxu0 0
      %680 = vmatprep.subr.bf16.mxu0 0
      %681 = vmatpush1.bf16.msra.mxu0 0
      %682 = vmatprep.subr.bf16.mxu0 0
      %683 = vmatpush1.bf16.msra.mxu0 0
      %684 = vmatprep.subr.bf16.mxu0 0
      %685 = vmatpush1.bf16.msra.mxu0 0
      %686 = vmatprep.subr.bf16.mxu0 0
      %687 = vmatpush1.bf16.msra.mxu0 0
      %688 = vmatprep.subr.bf16.mxu0 0
      %689 = vmatpush1.bf16.msra.mxu0 0
      %690 = vmatprep.subr.bf16.mxu0 0
      %691 = vmatpush1.bf16.msra.mxu0 0
      %692 = vmatprep.subr.bf16.mxu0 0
      %693 = vmatpush1.bf16.msra.mxu0 0
      %694 = vmatprep.subr.bf16.mxu0 0
      %695 = vmatpush1.bf16.msra.mxu0 0
      %696 = vmatprep.subr.bf16.mxu0 0
      %697 = vmatpush1.bf16.msra.mxu0 0
      %698 = vmatprep.mubr.bf16.mxu0 0
      %699 = vmatmul.mubr.bf16.gmra.mrb[0].mxu0 %v664
      %v700 = vpop.f32.mrb[0].mxu0
      %v701 = vadd.f32 0.0, %v700
      %v702 = vpop.f32.mrb[0].mxu0
      %v703 = vpop.f32.mrb[0].mxu0
      %v704 = vadd.f32 0.0, %v703
      %v705 = vpop.f32.mrb[0].mxu0
      %706 = vdwg.mxu0
      %v707 = vrcp.pop %v655
      %v708 = vrcp.pop %v658
      %v709 = vmul.f32 %v701, %v707
      %v710 = vmul.f32 %v704, %v708
      %711 = vrot.lane.b32.xlu0 %v338, 104
      %v712 = vpop.permute.xlu0 %711
      %713 = vrot.lane.b32.xlu0 %v339, 72
      %v714 = vpop.permute.xlu0 %713
      %v716 = vsel %vm343, %v712, 0
      %v719 = vsel %vm343, %v714, 0
      %721 = vmatprep.subr.bf16.mxu0 0
      %722 = vmatpush1.bf16.xpose.msra.mxu0 %v719
      %723 = vmatprep.subr.bf16.mxu0 0
      %724 = vmatpush1.bf16.xpose.msra.mxu0 0
      %725 = vmatprep.subr.bf16.mxu0 0
      %726 = vmatpush1.bf16.xpose.msra.mxu0 0
      %727 = vmatprep.subr.bf16.mxu0 0
      %728 = vmatpush1.bf16.xpose.msra.mxu0 0
      %729 = vmatprep.subr.bf16.mxu0 0
      %730 = vmatpush1.bf16.xpose.msra.mxu0 0
      %731 = vmatprep.subr.bf16.mxu0 0
      %732 = vmatpush1.bf16.xpose.msra.mxu0 0
      %733 = vmatprep.subr.bf16.mxu0 0
      %734 = vmatpush1.bf16.xpose.msra.mxu0 0
      %735 = vmatprep.subr.bf16.mxu0 0
      %736 = vmatpush1.bf16.xpose.msra.mxu0 0
      %737 = vmatprep.subr.bf16.mxu0 0
      %738 = vmatpush1.bf16.xpose.msra.mxu0 0
      %739 = vmatprep.subr.bf16.mxu0 0
      %740 = vmatpush1.bf16.xpose.msra.mxu0 0
      %741 = vmatprep.subr.bf16.mxu0 0
      %742 = vmatpush1.bf16.xpose.msra.mxu0 0
      %743 = vmatprep.subr.bf16.mxu0 0
      %744 = vmatpush1.bf16.xpose.msra.mxu0 0
      %745 = vmatprep.subr.bf16.mxu0 0
      %746 = vmatpush1.bf16.xpose.msra.mxu0 0
      %747 = vmatprep.subr.bf16.mxu0 0
      %748 = vmatpush1.bf16.xpose.msra.mxu0 0
      %749 = vmatprep.subr.bf16.mxu0 0
      %750 = vmatpush1.bf16.xpose.msra.mxu0 0
      %751 = vmatprep.subr.bf16.mxu0 0
      %752 = vmatpush1.bf16.xpose.msra.mxu0 0
      %753 = vmatprep.mubr.bf16.mxu0 0
      %754 = vmatmul.mubr.bf16.gmra.mrb[0].mxu0 %v716
      %v755 = vpop.f32.mrb[0].mxu0
      %v756 = vadd.f32 0.0, %v755
      %v757 = vpop.f32.mrb[0].mxu0
      %v758 = vpop.f32.mrb[0].mxu0
      %v759 = vadd.f32 0.0, %v758
      %v760 = vpop.f32.mrb[0].mxu0
      %761 = vdwg.mxu0
      %v762 = vsel %vm334, %v756, -1e+30
      %v763 = vsel %vm335, %v759, -1e+30
      %v764 = vsel %vm393, %v762, -inf
      %765 = vmax.xlane.f32.xlu0 %v764
      %v766 = vpop.xlane.xlu0 %765
      %v767 = vsel %vm393, %v763, -inf
      %768 = vmax.xlane.f32.xlu0 %v767
      %v769 = vpop.xlane.xlu0 %768
      %v770 = vsub.f32 %v762, %v766
      %v771 = vsub.f32 %v763, %v769
      %v772 = vmul.f32 %v770, 1.442695
      %v773 = vpow.pop %v772
      %v774 = vmul.f32 %v771, 1.442695
      %v775 = vpow.pop %v774
      %v776 = vsel %vm393, %v773, 0.0
      %777 = vadd.xlane.f32.xlu0 %v776
      %v778 = vpop.xlane.xlu0 %777
      %v779 = vsel %vm393, %v775, 0.0
      %780 = vadd.xlane.f32.xlu0 %v779
      %v781 = vpop.xlane.xlu0 %780
      %v782 = vpack.c.bf16 %v775, %v773
      %783 = vrot.lane.b32.xlu0 %v339, 40
      %v784 = vpop.permute.xlu0 %783
      %v787 = vsel %vm393, %v782, 0
      %789 = vmatprep.subr.bf16.mxu0 0
      %790 = vmatpush1.bf16.msra.mxu0 %v784
      %791 = vmatprep.subr.bf16.mxu0 0
      %792 = vmatpush1.bf16.msra.mxu0 0
      %793 = vmatprep.subr.bf16.mxu0 0
      %794 = vmatpush1.bf16.msra.mxu0 0
      %795 = vmatprep.subr.bf16.mxu0 0
      %796 = vmatpush1.bf16.msra.mxu0 0
      %797 = vmatprep.subr.bf16.mxu0 0
      %798 = vmatpush1.bf16.msra.mxu0 0
      %799 = vmatprep.subr.bf16.mxu0 0
      %800 = vmatpush1.bf16.msra.mxu0 0
      %801 = vmatprep.subr.bf16.mxu0 0
      %802 = vmatpush1.bf16.msra.mxu0 0
      %803 = vmatprep.subr.bf16.mxu0 0
      %804 = vmatpush1.bf16.msra.mxu0 0
      %805 = vmatprep.subr.bf16.mxu0 0
      %806 = vmatpush1.bf16.msra.mxu0 0
      %807 = vmatprep.subr.bf16.mxu0 0
      %808 = vmatpush1.bf16.msra.mxu0 0
      %809 = vmatprep.subr.bf16.mxu0 0
      %810 = vmatpush1.bf16.msra.mxu0 0
      %811 = vmatprep.subr.bf16.mxu0 0
      %812 = vmatpush1.bf16.msra.mxu0 0
      %813 = vmatprep.subr.bf16.mxu0 0
      %814 = vmatpush1.bf16.msra.mxu0 0
      %815 = vmatprep.subr.bf16.mxu0 0
      %816 = vmatpush1.bf16.msra.mxu0 0
      %817 = vmatprep.subr.bf16.mxu0 0
      %818 = vmatpush1.bf16.msra.mxu0 0
      %819 = vmatprep.subr.bf16.mxu0 0
      %820 = vmatpush1.bf16.msra.mxu0 0
      %821 = vmatprep.mubr.bf16.mxu0 0
      %822 = vmatmul.mubr.bf16.gmra.mrb[0].mxu0 %v787
      %v823 = vpop.f32.mrb[0].mxu0
      %v824 = vadd.f32 0.0, %v823
      %v825 = vpop.f32.mrb[0].mxu0
      %v826 = vpop.f32.mrb[0].mxu0
      %v827 = vadd.f32 0.0, %v826
      %v828 = vpop.f32.mrb[0].mxu0
      %829 = vdwg.mxu0
      %v830 = vrcp.pop %v778
      %v831 = vrcp.pop %v781
      %v832 = vmul.f32 %v824, %v830
      %v833 = vmul.f32 %v827, %v831
      %836 = vrot.lane.b32.xlu0 %v586, 8
      %v837 = vpop.permute.xlu0 %836
      %838 = vrot.lane.b32.xlu0 %v587, 8
      %v839 = vpop.permute.xlu0 %838
      %844 = vrot.lane.b32.xlu0 %v709, 16
      %v845 = vpop.permute.xlu0 %844
      %846 = vrot.lane.b32.xlu0 %v710, 16
      %v847 = vpop.permute.xlu0 %846
      %852 = vrot.lane.b32.xlu0 %v832, 24
      %v853 = vpop.permute.xlu0 %852
      %854 = vrot.lane.b32.xlu0 %v833, 24
      %v855 = vpop.permute.xlu0 %854
      %v858 = vsel %vm343, %v462, %v837
      %v859 = vsel %vm343, %v463, %v839
      %v860 = vsel %vm393, %v858, %v845
      %v861 = vsel %vm393, %v859, %v847
      %vm862 = vcmask 195584
      %v863 = vsel %vm862, %v860, %v853
      %v864 = vsel %vm862, %v861, %v855
      %v865 = vpack.c.bf16 %v864, %v863
      %v866 = vld [vmem:[%s2] sm:$0xf]
      %v867 = vld [vmem:[%s2 + $0x4] sm:$0xf]
      %v868 = vld [vmem:[%s2 + $0x8] sm:$0xf]
      %v869 = vld [vmem:[%s2 + $0xc] sm:$0xf]
      %v870 = vld [vmem:[%s3] sm:$0x1]
      %v872 = vlaneseq
      %v873 = vshrl.u32 %v872, 7
      %v874 = vsub.s32 0, %v873
      %v875 = vrot.slane %v870, %v874
      %v881 = vunpack.c.l.b16 %v866
      %v882 = vunpack.c.l.b16 %v867
      %v883 = vunpack.c.l.b16 %v868
      %v884 = vunpack.c.l.b16 %v869
      %v885 = vpack.c.b16 %v882, %v881
      %v886 = vpack.c.b16 %v884, %v883
      %vm889 = vcmask 261120
      %v891 = vsel %vm889, %v865, 0
      %893 = vmatprep.subr.bf16.mxu0 0
      %894 = vmatpush1.bf16.msra.mxu0 %v885
      %895 = vmatprep.subr.bf16.mxu0 0
      %896 = vmatpush1.bf16.msra.mxu0 %v886
      %897 = vmatprep.subr.bf16.mxu0 0
      %898 = vmatpush1.bf16.msra.mxu0 0
      %899 = vmatprep.subr.bf16.mxu0 0
      %900 = vmatpush1.bf16.msra.mxu0 0
      %901 = vmatprep.subr.bf16.mxu0 0
      %902 = vmatpush1.bf16.msra.mxu0 0
      %903 = vmatprep.subr.bf16.mxu0 0
      %904 = vmatpush1.bf16.msra.mxu0 0
      %905 = vmatprep.subr.bf16.mxu0 0
      %906 = vmatpush1.bf16.msra.mxu0 0
      %907 = vmatprep.subr.bf16.mxu0 0
      %908 = vmatpush1.bf16.msra.mxu0 0
      %909 = vmatprep.subr.bf16.mxu0 0
      %910 = vmatpush1.bf16.msra.mxu0 0
      %911 = vmatprep.subr.bf16.mxu0 0
      %912 = vmatpush1.bf16.msra.mxu0 0
      %913 = vmatprep.subr.bf16.mxu0 0
      %914 = vmatpush1.bf16.msra.mxu0 0
      %915 = vmatprep.subr.bf16.mxu0 0
      %916 = vmatpush1.bf16.msra.mxu0 0
      %917 = vmatprep.subr.bf16.mxu0 0
      %918 = vmatpush1.bf16.msra.mxu0 0
      %919 = vmatprep.subr.bf16.mxu0 0
      %920 = vmatpush1.bf16.msra.mxu0 0
      %921 = vmatprep.subr.bf16.mxu0 0
      %922 = vmatpush1.bf16.msra.mxu0 0
      %923 = vmatprep.subr.bf16.mxu0 0
      %924 = vmatpush1.bf16.msra.mxu0 0
      %925 = vmatprep.mubr.bf16.mxu0 0
      %926 = vmatmul.mubr.bf16.gmra.mrb[0].mxu0 %v891
      %v927 = vpop.f32.mrb[0].mxu0
      %v928 = vadd.f32 %v875, %v927
      %v929 = vpop.f32.mrb[0].mxu0
      %v930 = vpop.f32.mrb[0].mxu0
      %v931 = vadd.f32 %v875, %v930
      %v932 = vpop.f32.mrb[0].mxu0
      %933 = vdwg.mxu0
      %v934 = vld [vmem:[%s308] sm:$0xff]
      %v935 = vld [vmem:[%s308 + $0x8] sm:$0xff]
      %v936 = vadd.f32 %v934, %v928
      %v937 = vadd.f32 %v935, %v931
      %938 = vst.msk [vmem:[%s318] sm:$0xff] %vm889, %v936
      %939 = vst.msk [vmem:[%s318 + $0x8] sm:$0xff] %vm889, %v937
      %s940 = smul.u32 2, %s21
      %p941 = scmp.lt.s32.totalorder %s20, 1
      %s942 = scalar_select %p941, %s20, 1
      %p943 = scmp.lt.s32.totalorder %s940, 1
      %s944 = scalar_select %p943, %s940, 1
      %s945 = smul.addr %s942, 2
      %s946 = sadd.s32 %s944, %s945
      %s947 = smul.addr %s946, 8
      %s948 = scalar_lea.vmem %s5, %s947
      // Predicated region
      $region41: #{transformer_forward.10} parent=39 // pred_check
        %p949 = pneg %p172
      $region42: #{transformer_forward.10} parent=39 // pred_check_branch
        %951 = sbr.rel (%p949) target = $region44
      $region43: #{transformer_forward.10} parent=39 // pred_region
        %s952 = smul.u32 2, %s21
      $region44: #{transformer_forward.10} parent=39 // pred_fallthru
        _
    $region40: #{transformer_forward.10} parent=5 // pred_fallthru
      _
    %p953 = scmp.le.s32.totalorder 2, %s11
    // Predicated region
    $region45: #{transformer_forward.10} parent=5 // pred_check
      %p954 = pneg %p953
    $region46: #{transformer_forward.10} parent=5 // pred_check_branch
      %956 = sbr.rel (%p954) target = $region48
    $region47: #{transformer_forward.10} parent=5 // pred_region
      %s957 = ssub.s32 %s11, 2
      // Predicated region
      $region49: #{transformer_forward.10} parent=47 // pred_check
        %p958 = pneg %p178
      $region50: #{transformer_forward.10} parent=47 // pred_check_branch
        %960 = sbr.rel (%p958) target = $region52
      $region51: #{transformer_forward.10} parent=47 // pred_region
        %s961 = smul.u32 2, %s23
        %p962 = scmp.lt.s32.totalorder %s22, 1
        %s963 = scalar_select %p962, %s22, 1
        %p964 = scmp.lt.s32.totalorder %s961, 1
        %s965 = scalar_select %p964, %s961, 1
        %s966 = smul.addr %s963, 2
        %s967 = sadd.s32 %s965, %s966
        %s968 = smul.addr %s967, 8
        %s969 = scalar_lea.vmem %s5, %s968
      $region52: #{transformer_forward.10} parent=47 // pred_fallthru
        _
    $region48: #{transformer_forward.10} parent=5 // pred_fallthru
      _
  $region6: #{transformer_forward.10} parent=0 // loop_footer
    %s15 = sadd.s32 1, %s11
  $region7: #{transformer_forward.10} parent=0 // loop_footer_branch
    %10 = sbr.rel target = $region3
  $region8: #{transformer_forward.10} parent=0 // loop_exit
    _

// kernel: squeeze.1
$region0: #{squeeze.1}
  %s0 = inlined_call_operand.vmem [shape: f32[16], index: 0, kind: input, shape index: {}]
  %s1 = inlined_call_operand.hbm [shape: f32[2,8], index: 1, kind: output, shape index: {}]
  $region1: #{squeeze.1} parent=0
    #allocation0 [shape = 'u8[1024]{0}', space=vmem, size = 0x400, scoped, tag = 'operand span for operand 1']
    #allocation1 [shape = 's32[1]{0}', space=sflag, size = 0x4, scoped, tag = 'scoped memory for squeeze.1']
    #allocation2 [shape = 'u8[4096]{0}', space=vmem, size = 0x1000, scoped, tag = 'scoped mem for output reshape']
    #allocation3 [shape = 'u8[4096]{0}', space=vmem, size = 0x1000, scoped, tag = 'scoped mem for input reshape']
    %2 = vsyncpa [#allocation1], 0
    %s4 = sshllo.u32 0, 1
    %v5 = vld [vmem:[%s0] sm:%s4]
    %6 = vst [vmem:[#allocation3] sm:%s4] %v5
    %v7 = vld [vmem:[#allocation3] sm:$0x1]
    %vm8 = vcmask 64512
    %9 = vst.msk [vmem:[#allocation2] sm:$0x1] %vm8, %v7
    %v10 = vld [vmem:[#allocation3] sm:$0x1]
    %11 = vrot.lane.b32.xlu0 %v10, 120
    %v12 = vpop.permute.xlu0 %11
    %vm13 = vcmask 64512
    %s14 = scalar_lea.vmem [#allocation2], 1
    %15 = vst.msk [vmem:[%s14] sm:$0x1] %vm13, %v12
    %s17 = sshllo.u32 0, 2
    %v19 = vld [vmem:[#allocation2] sm:%s17]
    %s20 = sshllo.u32 0, 2
    %21 = vst [vmem:[#allocation0] sm:%s20] %v19
    %s23 = ssub.s32 32, 32
    %24 = vsyncadd [#allocation1], %s23
    %s26 = sshll.u32 [#allocation0], 4
    %s27 = int_to_ptr.vmem [resolvable:$true] %s26
    %29 = dma.vmem_to_hbm [thread:$0]  %s27, 32, %s1, [#allocation1]
    %30 = dma.done [#allocation1], 32
    %31 = vsyncpa [#allocation1], 1

// kernel: transformer_forward.15
$region0: #{transformer_forward.15}
  #allocation0 [shape = 'u32[]', space=smem, size = 0x4, offset = 0x4, fixed_abs, tag = 'smem constant byte address 0x4 - core index']
  #allocation1 [shape = 'u32[144,128]{1,0:T(1,128)}', space=vmem, size = 0x12000, scoped, tag = 'internal scratch']
  %s0 = inlined_call_operand.vmem [shape: f32[16,32], index: 0, kind: input, shape index: {}]
  %s1 = inlined_call_operand.vmem [shape: f32[1,32], index: 1, kind: input, shape index: {}]
  %s2 = inlined_call_operand.vmem [shape: f32[1,32], index: 2, kind: input, shape index: {}]
  %s3 = inlined_call_operand.vmem [shape: bf16[32,128], index: 3, kind: input, shape index: {}]
  %s4 = inlined_call_operand.vmem [shape: f32[1,128], index: 4, kind: input, shape index: {}]
  %s5 = inlined_call_operand.vmem [shape: f32[16,128], index: 5, kind: output, shape index: {}]
  %s6 = sld [smem:[#allocation0]]
  $region30: #{transformer_forward.15} parent=0
    _
  %s8 = ssub.s32 1, %s6
  %s9 = scalar_select 0, %s8, %s6
  // Predicated region
  $region2: #{transformer_forward.15} parent=0 // pred_check
    _
  $region3: #{transformer_forward.15} parent=0 // pred_check_branch
    %11 = sbr.rel (0) target = $region5
  $region4: #{transformer_forward.15} parent=0 // pred_region
    _
  $region5: #{transformer_forward.15} parent=0 // pred_fallthru
    _
  // Predicated region
  $region6: #{transformer_forward.15} parent=0 // pred_check
    _
  $region7: #{transformer_forward.15} parent=0 // pred_check_branch
    %13 = sbr.rel (0) target = $region9
  $region8: #{transformer_forward.15} parent=0 // pred_region
    _
  $region9: #{transformer_forward.15} parent=0 // pred_fallthru
    _
  // Predicated region
  $region10: #{transformer_forward.15} parent=0 // pred_check
    _
  $region11: #{transformer_forward.15} parent=0 // pred_check_branch
    %15 = sbr.rel (0) target = $region13
  $region12: #{transformer_forward.15} parent=0 // pred_region
    _
  $region13: #{transformer_forward.15} parent=0 // pred_fallthru
    _
  // Predicated region
  $region14: #{transformer_forward.15} parent=0 // pred_check
    _
  $region15: #{transformer_forward.15} parent=0 // pred_check_branch
    %17 = sbr.rel (0) target = $region17
  $region16: #{transformer_forward.15} parent=0 // pred_region
    _
  $region17: #{transformer_forward.15} parent=0 // pred_fallthru
    _
  // Predicated region
  $region18: #{transformer_forward.15} parent=0 // pred_check
    _
  $region19: #{transformer_forward.15} parent=0 // pred_check_branch
    %19 = sbr.rel (0) target = $region21
  $region20: #{transformer_forward.15} parent=0 // pred_region
    _
  $region21: #{transformer_forward.15} parent=0 // pred_fallthru
    _
  %v21 = vld [vmem:[%s0] sm:$0xff]
  %v22 = vld [vmem:[%s0 + $0x8] sm:$0xff]
  %v23 = vld [vmem:[%s1] sm:$0x1]
  %v24 = vld [vmem:[%s2] sm:$0x1]
  %vm25 = vcmask 261120
  %v26 = vsel %vm25, %v21, 0.0
  %27 = vadd.xlane.f32.xlu0 %v26
  %v28 = vpop.xlane.xlu0 %27
  %v29 = vsel %vm25, %v22, 0.0
  %30 = vadd.xlane.f32.xlu0 %v29
  %v31 = vpop.xlane.xlu0 %30
  %v32 = vrcp.pop 32.0
  %v33 = vmul.f32 %v28, %v32
  %v34 = vmul.f32 %v31, %v32
  %v35 = vsub.f32 %v21, %v33
  %v36 = vsub.f32 %v22, %v34
  %v37 = vmul.f32 %v35, %v35
  %v38 = vmul.f32 %v36, %v36
  %v39 = vsel %vm25, %v37, 0.0
  %40 = vadd.xlane.f32.xlu0 %v39
  %v41 = vpop.xlane.xlu0 %40
  %v42 = vsel %vm25, %v38, 0.0
  %43 = vadd.xlane.f32.xlu0 %v42
  %v44 = vpop.xlane.xlu0 %43
  %v45 = vmul.f32 %v41, %v32
  %v46 = vmul.f32 %v44, %v32
  %v47 = vadd.f32 %v45, 1e-05
  %v48 = vadd.f32 %v46, 1e-05
  %v49 = vrsqrt.pop %v47
  %v50 = vrsqrt.pop %v48
  %v51 = vmul.f32 %v35, %v49
  %v52 = vmul.f32 %v36, %v50
  %v54 = vlaneseq
  %v55 = vshrl.u32 %v54, 7
  %v56 = vsub.s32 0, %v55
  %v57 = vrot.slane %v23, %v56
  %v59 = vmul.f32 %v51, %v57
  %v60 = vmul.f32 %v52, %v57
  %v62 = vlaneseq
  %v63 = vshrl.u32 %v62, 7
  %v64 = vsub.s32 0, %v63
  %v65 = vrot.slane %v24, %v64
  %v67 = vadd.f32 %v59, %v65
  %v68 = vadd.f32 %v60, %v65
  %v69 = vpack.c.bf16 %v68, %v67
  %v70 = vld [vmem:[%s3] sm:$0xf]
  %v71 = vld [vmem:[%s3 + $0x4] sm:$0xf]
  %v72 = vld [vmem:[%s3 + $0x8] sm:$0xf]
  %v73 = vld [vmem:[%s3 + $0xc] sm:$0xf]
  %v74 = vld [vmem:[%s4] sm:$0x1]
  %v76 = vlaneseq
  %v77 = vshrl.u32 %v76, 7
  %v78 = vsub.s32 0, %v77
  %v79 = vrot.slane %v74, %v78
  %v85 = vunpack.c.l.b16 %v70
  %v86 = vunpack.c.l.b16 %v71
  %v87 = vunpack.c.l.b16 %v72
  %v88 = vunpack.c.l.b16 %v73
  %v89 = vpack.c.b16 %v86, %v85
  %v90 = vpack.c.b16 %v88, %v87
  %v94 = vsel %vm25, %v69, 0
  %96 = vmatprep.subr.bf16.mxu0 0
  %97 = vmatpush1.bf16.msra.mxu0 %v89
  %98 = vmatprep.subr.bf16.mxu0 0
  %99 = vmatpush1.bf16.msra.mxu0 %v90
  %100 = vmatprep.subr.bf16.mxu0 0
  %101 = vmatpush1.bf16.msra.mxu0 0
  %102 = vmatprep.subr.bf16.mxu0 0
  %103 = vmatpush1.bf16.msra.mxu0 0
  %104 = vmatprep.subr.bf16.mxu0 0
  %105 = vmatpush1.bf16.msra.mxu0 0
  %106 = vmatprep.subr.bf16.mxu0 0
  %107 = vmatpush1.bf16.msra.mxu0 0
  %108 = vmatprep.subr.bf16.mxu0 0
  %109 = vmatpush1.bf16.msra.mxu0 0
  %110 = vmatprep.subr.bf16.mxu0 0
  %111 = vmatpush1.bf16.msra.mxu0 0
  %112 = vmatprep.subr.bf16.mxu0 0
  %113 = vmatpush1.bf16.msra.mxu0 0
  %114 = vmatprep.subr.bf16.mxu0 0
  %115 = vmatpush1.bf16.msra.mxu0 0
  %116 = vmatprep.subr.bf16.mxu0 0
  %117 = vmatpush1.bf16.msra.mxu0 0
  %118 = vmatprep.subr.bf16.mxu0 0
  %119 = vmatpush1.bf16.msra.mxu0 0
  %120 = vmatprep.subr.bf16.mxu0 0
  %121 = vmatpush1.bf16.msra.mxu0 0
  %122 = vmatprep.subr.bf16.mxu0 0
  %123 = vmatpush1.bf16.msra.mxu0 0
  %124 = vmatprep.subr.bf16.mxu0 0
  %125 = vmatpush1.bf16.msra.mxu0 0
  %126 = vmatprep.subr.bf16.mxu0 0
  %127 = vmatpush1.bf16.msra.mxu0 0
  %128 = vmatprep.mubr.bf16.mxu0 0
  %129 = vmatmul.mubr.bf16.gmra.mrb[0].mxu0 %v94
  %v130 = vpop.f32.mrb[0].mxu0
  %v131 = vadd.f32 %v79, %v130
  %v132 = vpop.f32.mrb[0].mxu0
  %v133 = vpop.f32.mrb[0].mxu0
  %v134 = vadd.f32 %v79, %v133
  %v135 = vpop.f32.mrb[0].mxu0
  %136 = vdwg.mxu0
  %137 = vst [vmem:[%s5] sm:$0xff] %v131
  %138 = vst [vmem:[%s5 + $0x8] sm:$0xff] %v134
  // Predicated region
  $region22: #{transformer_forward.15} parent=0 // pred_check
    _
  $region23: #{transformer_forward.15} parent=0 // pred_check_branch
    %140 = sbr.rel (0) target = $region25
  $region24: #{transformer_forward.15} parent=0 // pred_region
    _
  $region25: #{transformer_forward.15} parent=0 // pred_fallthru
    _
  // Predicated region
  $region26: #{transformer_forward.15} parent=0 // pred_check
    _
  $region27: #{transformer_forward.15} parent=0 // pred_check_branch
    %142 = sbr.rel (0) target = $region29
  $region28: #{transformer_forward.15} parent=0 // pred_region
    _
  $region29: #{transformer_forward.15} parent=0 // pred_fallthru
    _

</llo_original>
